<compile_context>
chip_gen: v7x
topology: tpu7x:2x2x1
jax: 0.10.0
libtpu: 0.0.40
codegen_flags: <defaults>
</compile_context>

<pallas_src>
import functools

import jax
import jax.numpy as jnp
from jax.experimental import pallas as pl
from jax.experimental.pallas import tpu as pltpu

P = 4        # dim_scale
EPS = 1e-5   # nn.LayerNorm default eps


def _expand_norm_kernel(x_ref, w_ref, wmean_ref, s_ref, stg_ref, beta_ref,
                        o_ref, *, dim):
    """One (batch, row-block) tile.

    x_ref:     (1, TL, dim)        input tokens (TH full image rows, TL=TH*W)
    w_ref:     (dim, 16*dim)       expansion weight (W_linear.T), grid-invariant
    wmean_ref: (dim, 16)           per-(p1,p2)-chunk column means of W (1/dim folded)
    s_ref:     (4*dim, 4)          0/1 chunk-sum selector (f32)
    stg_ref:   (4, 4*dim)          chunk-broadcast selector with gamma folded in (f32)
    beta_ref:  (1, 4*dim)          beta tiled to group width (f32)
    o_ref:     (1, TH, 4, W, 4*dim)  pixel-shuffled output block
    """
    th = o_ref.shape[1]
    w_img = o_ref.shape[3]
    gsz = P * dim                       # channels per p1 group (4 * dim)
    inv_d = jnp.float32(1.0 / dim)

    x = x_ref[0]                        # (TL, dim), native dtype (MXU operand)
    S = s_ref[...]                      # (4*dim, 4)
    St_g = stg_ref[...]                 # (4, 4*dim)
    beta_b = beta_ref[...]              # (1, 4*dim)

    # Per-chunk means for all 16 (p1, p2) chunks in one tiny K=dim matmul
    # (mean is linear in x) -- replaces four f32 K=4*dim stat matmuls.
    mean_all = jnp.dot(x, wmean_ref[...],
                       preferred_element_type=jnp.float32)          # (TL, 16)

    # Static 4-way loop over p1: keeps only a (TL, 4*dim) f32 tile live and
    # makes each store a single full-width, lane-dense write.
    for p1 in range(P):
        w_p = w_ref[:, p1 * gsz:(p1 + 1) * gsz]                      # (dim, 4*dim)
        y = jnp.dot(x, w_p, preferred_element_type=jnp.float32)      # (TL, 4*dim) f32

        mean = mean_all[:, p1 * P:(p1 + 1) * P]                      # (TL, 4)
        ey2 = jnp.dot(y * y, S,
                      preferred_element_type=jnp.float32) * inv_d    # (TL, 4)
        var = ey2 - mean * mean                                      # E[y^2]-mean^2
        rstd = jax.lax.rsqrt(var + EPS)                              # (TL, 4)

        # Single fused scale/shift: normed = y * A + shift
        A = jnp.dot(rstd, St_g, preferred_element_type=jnp.float32)  # gamma*rstd, bcast
        shift = beta_b - jnp.dot(mean * rstd, St_g,
                                 preferred_element_type=jnp.float32)
        normed = y * A + shift                                       # (TL, 4*dim) f32

        # (TL, 4*dim) -> (TH, W, 4*dim): sublane split (free when W % 8 == 0).
        # Slot [h, p1, w, :] is exactly the pixel-shuffled destination.
        o_ref[0, :, p1, :, :] = normed.reshape(th, w_img, gsz).astype(o_ref.dtype)


def _pick_row_tile(H, W, target_tokens=512):
    """Rows of the (H, W) token grid per grid step: divides H, TH*W % 8 == 0."""
    th = max(1, min(H, max(1, target_tokens // max(W, 1))))
    while th > 1 and (H % th != 0 or (th * W) % 8 != 0):
        th -= 1
    if H % th != 0 or (th * W) % 8 != 0:
        th = H   # full-extent block along H is always legal
    return th


def final_patch_expand_x4(x, w_expand, gamma, beta, input_resolution,
                          *, target_tile_tokens=512):
    """x: (B, H*W, dim) -> (B, (4H)*(4W), dim), matching FinalPatchExpand_X4.

    w_expand: (dim, 16*dim) = nn.Linear(dim, 16*dim, bias=False).weight.T
    gamma, beta: (dim,) LayerNorm affine parameters.
    """
    H, W = input_resolution
    B, L, dim = x.shape
    assert L == H * W, "input feature has wrong size"
    C16 = 16 * dim
    gsz = P * dim

    th = _pick_row_tile(H, W, target_tile_tokens)
    tl = th * W

    # Precompute small grid-invariant operands in f32 (hoisted out of kernel).
    w32 = jnp.asarray(w_expand, jnp.float32)
    # Per-(p1,p2)-chunk column mean of W, with 1/dim folded in: (dim, 16).
    w_mean = w32.reshape(dim, P, P, dim).mean(-1).reshape(dim, P * P)

    gamma32 = jnp.asarray(gamma, jnp.float32).reshape(dim)
    beta32 = jnp.asarray(beta, jnp.float32).reshape(dim)
    col_chunk = jnp.arange(gsz, dtype=jnp.int32) // dim
    chunk_ids = jnp.arange(P, dtype=jnp.int32)
    S = (col_chunk[:, None] == chunk_ids[None, :]).astype(jnp.float32)   # (4*dim, 4)
    St = (chunk_ids[:, None] == col_chunk[None, :]).astype(jnp.float32)  # (4, 4*dim)
    St_g = St * jnp.tile(gamma32, P)[None, :]                            # gamma folded
    beta_b = jnp.tile(beta32, P).reshape(1, gsz)

    # MXU operands follow x.dtype (full-rate bf16 path for mixed precision).
    w_op = w32.astype(x.dtype)
    wmean_op = w_mean.astype(x.dtype)

    kernel = functools.partial(_expand_norm_kernel, dim=dim)

    out5 = pl.pallas_call(
        kernel,
        out_shape=jax.ShapeDtypeStruct((B, H, P, W, gsz), x.dtype),
        grid_spec=pltpu.PrefetchScalarGridSpec(
            num_scalar_prefetch=0,
            grid=(B, H // th),
            in_specs=[
                pl.BlockSpec((1, tl, dim), lambda b, hb: (b, hb, 0)),
                # weight / selector / affine params: grid-invariant blocks
                pl.BlockSpec((dim, C16), lambda b, hb: (0, 0)),
                pl.BlockSpec((dim, P * P), lambda b, hb: (0, 0)),
                pl.BlockSpec((gsz, P), lambda b, hb: (0, 0)),
                pl.BlockSpec((P, gsz), lambda b, hb: (0, 0)),
                pl.BlockSpec((1, gsz), lambda b, hb: (0, 0)),
            ],
            out_specs=pl.BlockSpec((1, th, P, W, gsz),
                                   lambda b, hb: (b, hb, 0, 0, 0)),
        ),
        compiler_params=pltpu.CompilerParams(
            dimension_semantics=("parallel", "parallel"),
            # 48 MiB: comfortably fits the ~512-token tile even at dim=96-128
            # in f32, and stays within v7x's 64 MiB physical VMEM.
            vmem_limit_bytes=48 * 1024 * 1024,
        ),
    )(x, w_op, wmean_op, S, St_g, beta_b)

    # (B, H, P, W, P*dim) already IS the rearranged tensor: row-major reshape
    # gives (B, 4H, 4W, dim) -> (B, 16*H*W, dim) with no data movement.
    return out5.reshape(B, (P * H) * (P * W), dim)


if __name__ == "__main__":
    key = jax.random.PRNGKey(0)
    k_x, k_w, k_g, k_b = jax.random.split(key, 4)

    B, H, W, dim = 2, 8, 8, 32
    L = H * W

    x = jax.random.normal(k_x, (B, L, dim), dtype=jnp.float32)
    # nn.Linear(dim, 16*dim, bias=False): weight is (16*dim, dim); we pass W^T.
    w_expand = jax.random.normal(k_w, (dim, 16 * dim), dtype=jnp.float32) * 0.05
    # LayerNorm(dim) affine params (deterministic, non-trivial).
    gamma = 1.0 + 0.1 * jax.random.normal(k_g, (dim,), dtype=jnp.float32)
    beta = 0.1 * jax.random.normal(k_b, (dim,), dtype=jnp.float32)

    out = final_patch_expand_x4(x, w_expand, gamma, beta, (H, W))
    out = jax.block_until_ready(out)
    assert out.shape == (B, (4 * H) * (4 * W), dim), out.shape

    # pure-JAX reference of the module semantics
    y_ref = x @ w_expand
    y_ref = y_ref.reshape(B, H, W, P, P, dim).transpose(0, 1, 3, 2, 4, 5)
    y_ref = y_ref.reshape(B, (P * H) * (P * W), dim)
    mu = y_ref.mean(-1, keepdims=True)
    var = ((y_ref - mu) ** 2).mean(-1, keepdims=True)
    y_ref = (y_ref - mu) * jax.lax.rsqrt(var + EPS) * gamma + beta
    err = float(jnp.max(jnp.abs(out - y_ref)))
    assert jnp.allclose(out, y_ref, atol=1e-4, rtol=1e-4), err

    print("KERNEL_OK")
</pallas_src>

<mosaic_0001>
module attributes {stable_mosaic.version = 11 : i64} {
  func.func @_expand_norm_kernel(%arg0: i32, %arg1: i32, %arg2: memref<1x64x32xf32, #tpu.memory_space<vmem>>, %arg3: memref<32x512xf32, #tpu.memory_space<vmem>>, %arg4: memref<32x16xf32, #tpu.memory_space<vmem>>, %arg5: memref<128x4xf32, #tpu.memory_space<vmem>>, %arg6: memref<4x128xf32, #tpu.memory_space<vmem>>, %arg7: memref<1x128xf32, #tpu.memory_space<vmem>>, %arg8: memref<1x8x4x8x128xf32, #tpu.memory_space<vmem>>) attributes {dimension_semantics = [#tpu.dimension_semantics<parallel>, #tpu.dimension_semantics<parallel>], iteration_bounds = array<i64: 2, 1>, scalar_prefetch = 0 : i64, scratch_operands = 0 : i64, tpu.core_type = #tpu.core_type<tc>, window_params = [{transform_indices = @transform_0, window_bounds = array<i64: 1, 64, 32>}, {pipeline_mode = #tpu.pipeline_mode<synchronous>, transform_indices = @transform_1, window_bounds = array<i64: 32, 512>}, {pipeline_mode = #tpu.pipeline_mode<synchronous>, transform_indices = @transform_2, window_bounds = array<i64: 32, 16>}, {pipeline_mode = #tpu.pipeline_mode<synchronous>, transform_indices = @transform_3, window_bounds = array<i64: 128, 4>}, {pipeline_mode = #tpu.pipeline_mode<synchronous>, transform_indices = @transform_4, window_bounds = array<i64: 4, 128>}, {pipeline_mode = #tpu.pipeline_mode<synchronous>, transform_indices = @transform_5, window_bounds = array<i64: 1, 128>}, {transform_indices = @transform_6, window_bounds = array<i64: 1, 8, 4, 8, 128>}]} {
    %c0 = arith.constant 0 : index
    %c0_0 = arith.constant 0 : index
    %c0_1 = arith.constant 0 : index
    %0 = vector.load %arg2[%c0, %c0_0, %c0_1] : memref<1x64x32xf32, #tpu.memory_space<vmem>>, vector<1x64x32xf32>
    %1 = vector.shape_cast %0 : vector<1x64x32xf32> to vector<64x32xf32>
    %c0_2 = arith.constant 0 : index
    %c0_3 = arith.constant 0 : index
    %2 = vector.load %arg5[%c0_2, %c0_3] : memref<128x4xf32, #tpu.memory_space<vmem>>, vector<128x4xf32>
    %c0_4 = arith.constant 0 : index
    %c0_5 = arith.constant 0 : index
    %3 = vector.load %arg6[%c0_4, %c0_5] : memref<4x128xf32, #tpu.memory_space<vmem>>, vector<4x128xf32>
    %c0_6 = arith.constant 0 : index
    %c0_7 = arith.constant 0 : index
    %4 = vector.load %arg7[%c0_6, %c0_7] : memref<1x128xf32, #tpu.memory_space<vmem>>, vector<1x128xf32>
    %c0_8 = arith.constant 0 : index
    %c0_9 = arith.constant 0 : index
    %5 = vector.load %arg4[%c0_8, %c0_9] : memref<32x16xf32, #tpu.memory_space<vmem>>, vector<32x16xf32>
    %cst = arith.constant dense<0.000000e+00> : vector<64x16xf32>
    %6 = tpu.matmul %1, %5, %cst {dimension_numbers = #tpu.dot_dimension_numbers<[1], [0], [0], [1], [0, 0, 1, 1], [], []>} : vector<64x32xf32>, vector<32x16xf32>, vector<64x16xf32> -> vector<64x16xf32>
    %c0_10 = arith.constant 0 : index
    %c0_11 = arith.constant 0 : index
    %7 = vector.load %arg3[%c0_10, %c0_11] : memref<32x512xf32, #tpu.memory_space<vmem>>, vector<32x128xf32>
    %cst_12 = arith.constant dense<0.000000e+00> : vector<64x128xf32>
    %8 = tpu.matmul %1, %7, %cst_12 {dimension_numbers = #tpu.dot_dimension_numbers<[1], [0], [0], [1], [0, 0, 1, 1], [], []>} : vector<64x32xf32>, vector<32x128xf32>, vector<64x128xf32> -> vector<64x128xf32>
    %9 = vector.extract_strided_slice %6 {offsets = [0, 0], sizes = [64, 4], strides = [1, 1]} : vector<64x16xf32> to vector<64x4xf32>
    %10 = arith.mulf %8, %8 : vector<64x128xf32>
    %cst_13 = arith.constant dense<0.000000e+00> : vector<64x4xf32>
    %11 = tpu.matmul %10, %2, %cst_13 {dimension_numbers = #tpu.dot_dimension_numbers<[1], [0], [0], [1], [0, 0, 1, 1], [], []>} : vector<64x128xf32>, vector<128x4xf32>, vector<64x4xf32> -> vector<64x4xf32>
    %cst_14 = arith.constant 3.125000e-02 : f32
    %12 = vector.broadcast %cst_14 : f32 to vector<64x4xf32>
    %13 = arith.mulf %11, %12 : vector<64x4xf32>
    %14 = arith.mulf %9, %9 : vector<64x4xf32>
    %15 = arith.subf %13, %14 : vector<64x4xf32>
    %cst_15 = arith.constant 9.99999974E-6 : f32
    %16 = vector.broadcast %cst_15 : f32 to vector<64x4xf32>
    %17 = arith.addf %15, %16 : vector<64x4xf32>
    %18 = math.rsqrt %17 : vector<64x4xf32>
    %cst_16 = arith.constant dense<0.000000e+00> : vector<64x128xf32>
    %19 = tpu.matmul %18, %3, %cst_16 {dimension_numbers = #tpu.dot_dimension_numbers<[1], [0], [0], [1], [0, 0, 1, 1], [], []>} : vector<64x4xf32>, vector<4x128xf32>, vector<64x128xf32> -> vector<64x128xf32>
    %20 = arith.mulf %9, %18 : vector<64x4xf32>
    %cst_17 = arith.constant dense<0.000000e+00> : vector<64x128xf32>
    %21 = tpu.matmul %20, %3, %cst_17 {dimension_numbers = #tpu.dot_dimension_numbers<[1], [0], [0], [1], [0, 0, 1, 1], [], []>} : vector<64x4xf32>, vector<4x128xf32>, vector<64x128xf32> -> vector<64x128xf32>
    %22 = vector.broadcast %4 : vector<1x128xf32> to vector<64x128xf32>
    %23 = arith.subf %22, %21 : vector<64x128xf32>
    %24 = arith.mulf %8, %19 : vector<64x128xf32>
    %25 = arith.addf %24, %23 : vector<64x128xf32>
    %26 = vector.shape_cast %25 : vector<64x128xf32> to vector<8x8x128xf32>
    %c0_18 = arith.constant 0 : index
    %c0_19 = arith.constant 0 : index
    %c0_20 = arith.constant 0 : index
    %c0_21 = arith.constant 0 : index
    %c0_22 = arith.constant 0 : index
    %27 = vector.load %arg8[%c0_18, %c0_19, %c0_20, %c0_21, %c0_22] : memref<1x8x4x8x128xf32, #tpu.memory_space<vmem>>, vector<1x8x1x8x128xf32>
    %28 = vector.shape_cast %27 : vector<1x8x1x8x128xf32> to vector<8x8x128xf32>
    %29 = vector.shape_cast %26 : vector<8x8x128xf32> to vector<1x8x1x8x128xf32>
    tpu.vector_store %arg8[%c0_18, %c0_19, %c0_20, %c0_21, %c0_22], %29 {strides = array<i32>} : memref<1x8x4x8x128xf32, #tpu.memory_space<vmem>>, vector<1x8x1x8x128xf32>,
    %c0_23 = arith.constant 0 : index
    %c128 = arith.constant 128 : index
    %30 = vector.load %arg3[%c0_23, %c128] : memref<32x512xf32, #tpu.memory_space<vmem>>, vector<32x128xf32>
    %cst_24 = arith.constant dense<0.000000e+00> : vector<64x128xf32>
    %31 = tpu.matmul %1, %30, %cst_24 {dimension_numbers = #tpu.dot_dimension_numbers<[1], [0], [0], [1], [0, 0, 1, 1], [], []>} : vector<64x32xf32>, vector<32x128xf32>, vector<64x128xf32> -> vector<64x128xf32>
    %32 = vector.extract_strided_slice %6 {offsets = [0, 4], sizes = [64, 4], strides = [1, 1]} : vector<64x16xf32> to vector<64x4xf32>
    %33 = arith.mulf %31, %31 : vector<64x128xf32>
    %cst_25 = arith.constant dense<0.000000e+00> : vector<64x4xf32>
    %34 = tpu.matmul %33, %2, %cst_25 {dimension_numbers = #tpu.dot_dimension_numbers<[1], [0], [0], [1], [0, 0, 1, 1], [], []>} : vector<64x128xf32>, vector<128x4xf32>, vector<64x4xf32> -> vector<64x4xf32>
    %cst_26 = arith.constant 3.125000e-02 : f32
    %35 = vector.broadcast %cst_26 : f32 to vector<64x4xf32>
    %36 = arith.mulf %34, %35 : vector<64x4xf32>
    %37 = arith.mulf %32, %32 : vector<64x4xf32>
    %38 = arith.subf %36, %37 : vector<64x4xf32>
    %cst_27 = arith.constant 9.99999974E-6 : f32
    %39 = vector.broadcast %cst_27 : f32 to vector<64x4xf32>
    %40 = arith.addf %38, %39 : vector<64x4xf32>
    %41 = math.rsqrt %40 : vector<64x4xf32>
    %cst_28 = arith.constant dense<0.000000e+00> : vector<64x128xf32>
    %42 = tpu.matmul %41, %3, %cst_28 {dimension_numbers = #tpu.dot_dimension_numbers<[1], [0], [0], [1], [0, 0, 1, 1], [], []>} : vector<64x4xf32>, vector<4x128xf32>, vector<64x128xf32> -> vector<64x128xf32>
    %43 = arith.mulf %32, %41 : vector<64x4xf32>
    %cst_29 = arith.constant dense<0.000000e+00> : vector<64x128xf32>
    %44 = tpu.matmul %43, %3, %cst_29 {dimension_numbers = #tpu.dot_dimension_numbers<[1], [0], [0], [1], [0, 0, 1, 1], [], []>} : vector<64x4xf32>, vector<4x128xf32>, vector<64x128xf32> -> vector<64x128xf32>
    %45 = vector.broadcast %4 : vector<1x128xf32> to vector<64x128xf32>
    %46 = arith.subf %45, %44 : vector<64x128xf32>
    %47 = arith.mulf %31, %42 : vector<64x128xf32>
    %48 = arith.addf %47, %46 : vector<64x128xf32>
    %49 = vector.shape_cast %48 : vector<64x128xf32> to vector<8x8x128xf32>
    %c0_30 = arith.constant 0 : index
    %c0_31 = arith.constant 0 : index
    %c1 = arith.constant 1 : index
    %c0_32 = arith.constant 0 : index
    %c0_33 = arith.constant 0 : index
    %50 = vector.load %arg8[%c0_30, %c0_31, %c1, %c0_32, %c0_33] : memref<1x8x4x8x128xf32, #tpu.memory_space<vmem>>, vector<1x8x1x8x128xf32>
    %51 = vector.shape_cast %50 : vector<1x8x1x8x128xf32> to vector<8x8x128xf32>
    %52 = vector.shape_cast %49 : vector<8x8x128xf32> to vector<1x8x1x8x128xf32>
    tpu.vector_store %arg8[%c0_30, %c0_31, %c1, %c0_32, %c0_33], %52 {strides = array<i32>} : memref<1x8x4x8x128xf32, #tpu.memory_space<vmem>>, vector<1x8x1x8x128xf32>,
    %c0_34 = arith.constant 0 : index
    %c256 = arith.constant 256 : index
    %53 = vector.load %arg3[%c0_34, %c256] : memref<32x512xf32, #tpu.memory_space<vmem>>, vector<32x128xf32>
    %cst_35 = arith.constant dense<0.000000e+00> : vector<64x128xf32>
    %54 = tpu.matmul %1, %53, %cst_35 {dimension_numbers = #tpu.dot_dimension_numbers<[1], [0], [0], [1], [0, 0, 1, 1], [], []>} : vector<64x32xf32>, vector<32x128xf32>, vector<64x128xf32> -> vector<64x128xf32>
    %55 = vector.extract_strided_slice %6 {offsets = [0, 8], sizes = [64, 4], strides = [1, 1]} : vector<64x16xf32> to vector<64x4xf32>
    %56 = arith.mulf %54, %54 : vector<64x128xf32>
    %cst_36 = arith.constant dense<0.000000e+00> : vector<64x4xf32>
    %57 = tpu.matmul %56, %2, %cst_36 {dimension_numbers = #tpu.dot_dimension_numbers<[1], [0], [0], [1], [0, 0, 1, 1], [], []>} : vector<64x128xf32>, vector<128x4xf32>, vector<64x4xf32> -> vector<64x4xf32>
    %cst_37 = arith.constant 3.125000e-02 : f32
    %58 = vector.broadcast %cst_37 : f32 to vector<64x4xf32>
    %59 = arith.mulf %57, %58 : vector<64x4xf32>
    %60 = arith.mulf %55, %55 : vector<64x4xf32>
    %61 = arith.subf %59, %60 : vector<64x4xf32>
    %cst_38 = arith.constant 9.99999974E-6 : f32
    %62 = vector.broadcast %cst_38 : f32 to vector<64x4xf32>
    %63 = arith.addf %61, %62 : vector<64x4xf32>
    %64 = math.rsqrt %63 : vector<64x4xf32>
    %cst_39 = arith.constant dense<0.000000e+00> : vector<64x128xf32>
    %65 = tpu.matmul %64, %3, %cst_39 {dimension_numbers = #tpu.dot_dimension_numbers<[1], [0], [0], [1], [0, 0, 1, 1], [], []>} : vector<64x4xf32>, vector<4x128xf32>, vector<64x128xf32> -> vector<64x128xf32>
    %66 = arith.mulf %55, %64 : vector<64x4xf32>
    %cst_40 = arith.constant dense<0.000000e+00> : vector<64x128xf32>
    %67 = tpu.matmul %66, %3, %cst_40 {dimension_numbers = #tpu.dot_dimension_numbers<[1], [0], [0], [1], [0, 0, 1, 1], [], []>} : vector<64x4xf32>, vector<4x128xf32>, vector<64x128xf32> -> vector<64x128xf32>
    %68 = vector.broadcast %4 : vector<1x128xf32> to vector<64x128xf32>
    %69 = arith.subf %68, %67 : vector<64x128xf32>
    %70 = arith.mulf %54, %65 : vector<64x128xf32>
    %71 = arith.addf %70, %69 : vector<64x128xf32>
    %72 = vector.shape_cast %71 : vector<64x128xf32> to vector<8x8x128xf32>
    %c0_41 = arith.constant 0 : index
    %c0_42 = arith.constant 0 : index
    %c2 = arith.constant 2 : index
    %c0_43 = arith.constant 0 : index
    %c0_44 = arith.constant 0 : index
    %73 = vector.load %arg8[%c0_41, %c0_42, %c2, %c0_43, %c0_44] : memref<1x8x4x8x128xf32, #tpu.memory_space<vmem>>, vector<1x8x1x8x128xf32>
    %74 = vector.shape_cast %73 : vector<1x8x1x8x128xf32> to vector<8x8x128xf32>
    %75 = vector.shape_cast %72 : vector<8x8x128xf32> to vector<1x8x1x8x128xf32>
    tpu.vector_store %arg8[%c0_41, %c0_42, %c2, %c0_43, %c0_44], %75 {strides = array<i32>} : memref<1x8x4x8x128xf32, #tpu.memory_space<vmem>>, vector<1x8x1x8x128xf32>,
    %c0_45 = arith.constant 0 : index
    %c384 = arith.constant 384 : index
    %76 = vector.load %arg3[%c0_45, %c384] : memref<32x512xf32, #tpu.memory_space<vmem>>, vector<32x128xf32>
    %cst_46 = arith.constant dense<0.000000e+00> : vector<64x128xf32>
    %77 = tpu.matmul %1, %76, %cst_46 {dimension_numbers = #tpu.dot_dimension_numbers<[1], [0], [0], [1], [0, 0, 1, 1], [], []>} : vector<64x32xf32>, vector<32x128xf32>, vector<64x128xf32> -> vector<64x128xf32>
    %78 = vector.extract_strided_slice %6 {offsets = [0, 12], sizes = [64, 4], strides = [1, 1]} : vector<64x16xf32> to vector<64x4xf32>
    %79 = arith.mulf %77, %77 : vector<64x128xf32>
    %cst_47 = arith.constant dense<0.000000e+00> : vector<64x4xf32>
    %80 = tpu.matmul %79, %2, %cst_47 {dimension_numbers = #tpu.dot_dimension_numbers<[1], [0], [0], [1], [0, 0, 1, 1], [], []>} : vector<64x128xf32>, vector<128x4xf32>, vector<64x4xf32> -> vector<64x4xf32>
    %cst_48 = arith.constant 3.125000e-02 : f32
    %81 = vector.broadcast %cst_48 : f32 to vector<64x4xf32>
    %82 = arith.mulf %80, %81 : vector<64x4xf32>
    %83 = arith.mulf %78, %78 : vector<64x4xf32>
    %84 = arith.subf %82, %83 : vector<64x4xf32>
    %cst_49 = arith.constant 9.99999974E-6 : f32
    %85 = vector.broadcast %cst_49 : f32 to vector<64x4xf32>
    %86 = arith.addf %84, %85 : vector<64x4xf32>
    %87 = math.rsqrt %86 : vector<64x4xf32>
    %cst_50 = arith.constant dense<0.000000e+00> : vector<64x128xf32>
    %88 = tpu.matmul %87, %3, %cst_50 {dimension_numbers = #tpu.dot_dimension_numbers<[1], [0], [0], [1], [0, 0, 1, 1], [], []>} : vector<64x4xf32>, vector<4x128xf32>, vector<64x128xf32> -> vector<64x128xf32>
    %89 = arith.mulf %78, %87 : vector<64x4xf32>
    %cst_51 = arith.constant dense<0.000000e+00> : vector<64x128xf32>
    %90 = tpu.matmul %89, %3, %cst_51 {dimension_numbers = #tpu.dot_dimension_numbers<[1], [0], [0], [1], [0, 0, 1, 1], [], []>} : vector<64x4xf32>, vector<4x128xf32>, vector<64x128xf32> -> vector<64x128xf32>
    %91 = vector.broadcast %4 : vector<1x128xf32> to vector<64x128xf32>
    %92 = arith.subf %91, %90 : vector<64x128xf32>
    %93 = arith.mulf %77, %88 : vector<64x128xf32>
    %94 = arith.addf %93, %92 : vector<64x128xf32>
    %95 = vector.shape_cast %94 : vector<64x128xf32> to vector<8x8x128xf32>
    %c0_52 = arith.constant 0 : index
    %c0_53 = arith.constant 0 : index
    %c3 = arith.constant 3 : index
    %c0_54 = arith.constant 0 : index
    %c0_55 = arith.constant 0 : index
    %96 = vector.load %arg8[%c0_52, %c0_53, %c3, %c0_54, %c0_55] : memref<1x8x4x8x128xf32, #tpu.memory_space<vmem>>, vector<1x8x1x8x128xf32>
    %97 = vector.shape_cast %96 : vector<1x8x1x8x128xf32> to vector<8x8x128xf32>
    %98 = vector.shape_cast %95 : vector<8x8x128xf32> to vector<1x8x1x8x128xf32>
    tpu.vector_store %arg8[%c0_52, %c0_53, %c3, %c0_54, %c0_55], %98 {strides = array<i32>} : memref<1x8x4x8x128xf32, #tpu.memory_space<vmem>>, vector<1x8x1x8x128xf32>,
    return
  }
  func.func @transform_0(%arg0: i32, %arg1: i32) -> (i32, i32, i32) {
    %c0_i32 = arith.constant 0 : i32
    %c0_i32_0 = arith.constant 0 : i32
    return %arg0, %arg1, %c0_i32 : i32, i32, i32
  }
  func.func @transform_1(%arg0: i32, %arg1: i32) -> (i32, i32) {
    %c0_i32 = arith.constant 0 : i32
    %c0_i32_0 = arith.constant 0 : i32
    %c0_i32_1 = arith.constant 0 : i32
    return %c0_i32, %c0_i32_0 : i32, i32
  }
  func.func @transform_2(%arg0: i32, %arg1: i32) -> (i32, i32) {
    %c0_i32 = arith.constant 0 : i32
    %c0_i32_0 = arith.constant 0 : i32
    %c0_i32_1 = arith.constant 0 : i32
    return %c0_i32, %c0_i32_0 : i32, i32
  }
  func.func @transform_3(%arg0: i32, %arg1: i32) -> (i32, i32) {
    %c0_i32 = arith.constant 0 : i32
    %c0_i32_0 = arith.constant 0 : i32
    %c0_i32_1 = arith.constant 0 : i32
    return %c0_i32, %c0_i32_0 : i32, i32
  }
  func.func @transform_4(%arg0: i32, %arg1: i32) -> (i32, i32) {
    %c0_i32 = arith.constant 0 : i32
    %c0_i32_0 = arith.constant 0 : i32
    %c0_i32_1 = arith.constant 0 : i32
    return %c0_i32, %c0_i32_0 : i32, i32
  }
  func.func @transform_5(%arg0: i32, %arg1: i32) -> (i32, i32) {
    %c0_i32 = arith.constant 0 : i32
    %c0_i32_0 = arith.constant 0 : i32
    %c0_i32_1 = arith.constant 0 : i32
    return %c0_i32, %c0_i32_0 : i32, i32
  }
  func.func @transform_6(%arg0: i32, %arg1: i32) -> (i32, i32, i32, i32, i32) {
    %c0_i32 = arith.constant 0 : i32
    %c0_i32_0 = arith.constant 0 : i32
    %c0_i32_1 = arith.constant 0 : i32
    %c0_i32_2 = arith.constant 0 : i32
    return %arg0, %arg1, %c0_i32, %c0_i32_0, %c0_i32_1 : i32, i32, i32, i32, i32
  }
}

</mosaic_0001>

<llo_original>
// kernel: tpu_custom_call.1
$region0: #{tpu_custom_call.1}
  #allocation0 [shape = 'u32[]', space=smem, size = 0x4, offset = 0x4, fixed_abs, tag = 'smem constant byte address 0x4 - core index']
  #allocation1 [shape = 'u32[144,128]{1,0:T(1,128)}', space=vmem, size = 0x12000, scoped, tag = 'internal scratch']
  %s0 = inlined_call_operand.vmem [shape: f32[2,64,32], index: 0, kind: input, shape index: {}]
  %s1 = inlined_call_operand.vmem [shape: f32[32,512], index: 1, kind: input, shape index: {}]
  %s2 = inlined_call_operand.vmem [shape: f32[32,16], index: 2, kind: input, shape index: {}]
  %s3 = inlined_call_operand.vmem [shape: f32[128,4], index: 3, kind: input, shape index: {}]
  %s4 = inlined_call_operand.vmem [shape: f32[4,128], index: 4, kind: input, shape index: {}]
  %s5 = inlined_call_operand.vmem [shape: f32[1,128], index: 5, kind: input, shape index: {}]
  %s6 = inlined_call_operand.hbm [shape: f32[2,8,4,8,128], index: 6, kind: output, shape index: {}]
  %s7 = sld [smem:[#allocation0]]
  $region57: #{tpu_custom_call.1} parent=0
    _
  %s9 = ssub.s32 1, %s7
  %s10 = scalar_select 0, %s9, %s7
  $region1: #{tpu_custom_call.1} parent=0
    #allocation2 [shape = 'u8[262144]{0}', space=vmem, size = 0x40000, scoped, tag = 'output window, operand 0']
    #allocation3 [shape = 's32[2]{0}', space=sflag, size = 0x8, scoped, tag = 'scoped memory for tpu_custom_call.1']
    %11 = vsyncpa [#allocation3], 0
    %s12 = scalar_lea.sflag [#allocation3], 1
    %13 = vsyncpa %s12, 0
    loop: start=0, step=1, limit=4
    $region2: #{tpu_custom_call.1} parent=1 // loop_pre_header
      _
    $region3: #{tpu_custom_call.1} parent=1 // loop_header
      %s15 = sphi 0, %s19
      %p16 = scmp.ge.s32.totalorder %s15, 4
      %s22 = sphi 0, %s34
      %s23 = sphi 0, %s30
      %s24 = sphi 0, %s22
      %s25 = sphi 0, %s23
      %s26 = sphi 0, %s24
      %s27 = sphi 0, %s25
      %s39 = sphi 0, %s41
      %s42 = sphi 0, %s39
      %s43 = sphi 0, %s42
      %s59 = sphi 0, %s43
      %s63 = sphi 0, %s63
      %s65 = sphi 0, %s63
      %s66 = sphi 0, %s65
      %s80 = sphi 0, %s66
      %s84 = sphi 0, %s84
      %s86 = sphi 0, %s84
      %s87 = sphi 0, %s86
      %s101 = sphi 0, %s87
      %s105 = sphi 0, %s105
      %s107 = sphi 0, %s105
      %s108 = sphi 0, %s107
      %s122 = sphi 0, %s108
      %s126 = sphi 0, %s126
      %s128 = sphi 0, %s126
      %s129 = sphi 0, %s128
      %s143 = sphi 0, %s129
      %s147 = sphi 0, %s147
      %s149 = sphi 0, %s147
      %s150 = sphi 0, %s149
      %s164 = sphi 0, %s150
      %s172 = sphi 0, %s174
      %s175 = sphi 0, %s172
      %s176 = sphi 0, %s175
      %s192 = sphi 0, %s176
    $region4: #{tpu_custom_call.1} parent=1 // loop_header_branch
      %18 = sbr.rel (%p16) target = $region8
    $region5: #{tpu_custom_call.1} parent=1 // loop_body
      %s20 = ssub.s32 %s15, 1
      %s21 = ssub.s32 %s15, 2
      %s28 = sadd.s32 1, %s23
      %p29 = scmp.ge.s32.totalorder %s28, 1
      %s30 = scalar_select %p29, 0, %s28
      %s31 = sadd.s32 1, %s22
      %s32 = scalar_select %p29, %s31, %s22
      %p33 = scmp.ge.s32.totalorder %s32, 2
      %s34 = scalar_select %p33, 0, %s32
      %s35 = ssub.s32 %s22, %s34
      %s36 = ssub.s32 %s23, %s30
      %s37 = sor.u32 %s35, %s36
      %p38 = scmp.eq.s32.totalorder %s37, 0
      %s40 = sadd.s32 %s39, 1
      %s41 = scalar_select %p38, %s39, %s40
      %p44 = pneg %p38
      %p45 = scmp.eq.s32.totalorder %s15, 1
      %p46 = por %p44, %p45
      %p47 = scmp.ne.s32.totalorder %s39, %s42
      %p48 = scmp.eq.s32.totalorder %s15, 0
      %p49 = por %p47, %p48
      %p50 = scmp.ne.s32.totalorder %s39, %s42
      %p51 = scmp.eq.s32.totalorder %s20, 1
      %p52 = por %p50, %p51
      %p53 = scmp.ne.s32.totalorder %s42, %s43
      %p54 = scmp.eq.s32.totalorder %s20, 0
      %p55 = por %p53, %p54
      %p56 = scmp.ne.s32.totalorder %s42, %s43
      %p57 = scmp.eq.s32.totalorder %s21, 1
      %p58 = por %p56, %p57
      %p60 = scmp.ne.s32.totalorder %s43, %s59
      %p61 = scmp.eq.s32.totalorder %s21, 0
      %p62 = por %p60, %p61
      %s64 = sadd.s32 %s63, 1
      %p67 = scmp.eq.s32.totalorder %s15, 1
      %p68 = scmp.ne.s32.totalorder %s63, %s65
      %p69 = scmp.eq.s32.totalorder %s15, 0
      %p70 = por %p68, %p69
      %p71 = scmp.ne.s32.totalorder %s63, %s65
      %p72 = scmp.eq.s32.totalorder %s20, 1
      %p73 = por %p71, %p72
      %p74 = scmp.ne.s32.totalorder %s65, %s66
      %p75 = scmp.eq.s32.totalorder %s20, 0
      %p76 = por %p74, %p75
      %p77 = scmp.ne.s32.totalorder %s65, %s66
      %p78 = scmp.eq.s32.totalorder %s21, 1
      %p79 = por %p77, %p78
      %p81 = scmp.ne.s32.totalorder %s66, %s80
      %p82 = scmp.eq.s32.totalorder %s21, 0
      %p83 = por %p81, %p82
      %s85 = sadd.s32 %s84, 1
      %p88 = scmp.eq.s32.totalorder %s15, 1
      %p89 = scmp.ne.s32.totalorder %s84, %s86
      %p90 = scmp.eq.s32.totalorder %s15, 0
      %p91 = por %p89, %p90
      %p92 = scmp.ne.s32.totalorder %s84, %s86
      %p93 = scmp.eq.s32.totalorder %s20, 1
      %p94 = por %p92, %p93
      %p95 = scmp.ne.s32.totalorder %s86, %s87
      %p96 = scmp.eq.s32.totalorder %s20, 0
      %p97 = por %p95, %p96
      %p98 = scmp.ne.s32.totalorder %s86, %s87
      %p99 = scmp.eq.s32.totalorder %s21, 1
      %p100 = por %p98, %p99
      %p102 = scmp.ne.s32.totalorder %s87, %s101
      %p103 = scmp.eq.s32.totalorder %s21, 0
      %p104 = por %p102, %p103
      %s106 = sadd.s32 %s105, 1
      %p109 = scmp.eq.s32.totalorder %s15, 1
      %p110 = scmp.ne.s32.totalorder %s105, %s107
      %p111 = scmp.eq.s32.totalorder %s15, 0
      %p112 = por %p110, %p111
      %p113 = scmp.ne.s32.totalorder %s105, %s107
      %p114 = scmp.eq.s32.totalorder %s20, 1
      %p115 = por %p113, %p114
      %p116 = scmp.ne.s32.totalorder %s107, %s108
      %p117 = scmp.eq.s32.totalorder %s20, 0
      %p118 = por %p116, %p117
      %p119 = scmp.ne.s32.totalorder %s107, %s108
      %p120 = scmp.eq.s32.totalorder %s21, 1
      %p121 = por %p119, %p120
      %p123 = scmp.ne.s32.totalorder %s108, %s122
      %p124 = scmp.eq.s32.totalorder %s21, 0
      %p125 = por %p123, %p124
      %s127 = sadd.s32 %s126, 1
      %p130 = scmp.eq.s32.totalorder %s15, 1
      %p131 = scmp.ne.s32.totalorder %s126, %s128
      %p132 = scmp.eq.s32.totalorder %s15, 0
      %p133 = por %p131, %p132
      %p134 = scmp.ne.s32.totalorder %s126, %s128
      %p135 = scmp.eq.s32.totalorder %s20, 1
      %p136 = por %p134, %p135
      %p137 = scmp.ne.s32.totalorder %s128, %s129
      %p138 = scmp.eq.s32.totalorder %s20, 0
      %p139 = por %p137, %p138
      %p140 = scmp.ne.s32.totalorder %s128, %s129
      %p141 = scmp.eq.s32.totalorder %s21, 1
      %p142 = por %p140, %p141
      %p144 = scmp.ne.s32.totalorder %s129, %s143
      %p145 = scmp.eq.s32.totalorder %s21, 0
      %p146 = por %p144, %p145
      %s148 = sadd.s32 %s147, 1
      %p151 = scmp.eq.s32.totalorder %s15, 1
      %p152 = scmp.ne.s32.totalorder %s147, %s149
      %p153 = scmp.eq.s32.totalorder %s15, 0
      %p154 = por %p152, %p153
      %p155 = scmp.ne.s32.totalorder %s147, %s149
      %p156 = scmp.eq.s32.totalorder %s20, 1
      %p157 = por %p155, %p156
      %p158 = scmp.ne.s32.totalorder %s149, %s150
      %p159 = scmp.eq.s32.totalorder %s20, 0
      %p160 = por %p158, %p159
      %p161 = scmp.ne.s32.totalorder %s149, %s150
      %p162 = scmp.eq.s32.totalorder %s21, 1
      %p163 = por %p161, %p162
      %p165 = scmp.ne.s32.totalorder %s150, %s164
      %p166 = scmp.eq.s32.totalorder %s21, 0
      %p167 = por %p165, %p166
      %s168 = ssub.s32 %s22, %s34
      %s169 = ssub.s32 %s23, %s30
      %s170 = sor.u32 %s168, %s169
      %p171 = scmp.eq.s32.totalorder %s170, 0
      %s173 = sadd.s32 %s172, 1
      %s174 = scalar_select %p171, %s172, %s173
      %p177 = pneg %p171
      %p178 = scmp.eq.s32.totalorder %s15, 1
      %p179 = por %p177, %p178
      %p180 = scmp.ne.s32.totalorder %s172, %s175
      %p181 = scmp.eq.s32.totalorder %s15, 0
      %p182 = por %p180, %p181
      %p183 = scmp.ne.s32.totalorder %s172, %s175
      %p184 = scmp.eq.s32.totalorder %s20, 1
      %p185 = por %p183, %p184
      %p186 = scmp.ne.s32.totalorder %s175, %s176
      %p187 = scmp.eq.s32.totalorder %s20, 0
      %p188 = por %p186, %p187
      %p189 = scmp.ne.s32.totalorder %s175, %s176
      %p190 = scmp.eq.s32.totalorder %s21, 1
      %p191 = por %p189, %p190
      %p193 = scmp.ne.s32.totalorder %s176, %s192
      %p194 = scmp.eq.s32.totalorder %s21, 0
      %p195 = por %p193, %p194
      %p196 = scmp.le.s32.totalorder 1, %s15
      %p197 = scmp.lt.s32.totalorder %s15, 3
      %p198 = pnand %p196, %p197
      %p199 = pneg %p198
      // Predicated region
      $region9: #{tpu_custom_call.1} parent=5 // pred_check
        _
      $region10: #{tpu_custom_call.1} parent=5 // pred_check_branch
        %201 = sbr.rel (%p198) target = $region12
      $region11: #{tpu_custom_call.1} parent=5 // pred_region
        %s202 = ssub.s32 %s15, 1
        // Predicated region
        $region13: #{tpu_custom_call.1} parent=11 // pred_check
          %p203 = pneg %p76
        $region14: #{tpu_custom_call.1} parent=11 // pred_check_branch
          %205 = sbr.rel (%p203) target = $region16
        $region15: #{tpu_custom_call.1} parent=11 // pred_region
          _
        $region16: #{tpu_custom_call.1} parent=11 // pred_fallthru
          _
        // Predicated region
        $region17: #{tpu_custom_call.1} parent=11 // pred_check
          %p206 = pneg %p97
        $region18: #{tpu_custom_call.1} parent=11 // pred_check_branch
          %208 = sbr.rel (%p206) target = $region20
        $region19: #{tpu_custom_call.1} parent=11 // pred_region
          _
        $region20: #{tpu_custom_call.1} parent=11 // pred_fallthru
          _
        // Predicated region
        $region21: #{tpu_custom_call.1} parent=11 // pred_check
          %p209 = pneg %p118
        $region22: #{tpu_custom_call.1} parent=11 // pred_check_branch
          %211 = sbr.rel (%p209) target = $region24
        $region23: #{tpu_custom_call.1} parent=11 // pred_region
          _
        $region24: #{tpu_custom_call.1} parent=11 // pred_fallthru
          _
        // Predicated region
        $region25: #{tpu_custom_call.1} parent=11 // pred_check
          %p212 = pneg %p139
        $region26: #{tpu_custom_call.1} parent=11 // pred_check_branch
          %214 = sbr.rel (%p212) target = $region28
        $region27: #{tpu_custom_call.1} parent=11 // pred_region
          _
        $region28: #{tpu_custom_call.1} parent=11 // pred_fallthru
          _
        // Predicated region
        $region29: #{tpu_custom_call.1} parent=11 // pred_check
          %p215 = pneg %p160
        $region30: #{tpu_custom_call.1} parent=11 // pred_check_branch
          %217 = sbr.rel (%p215) target = $region32
        $region31: #{tpu_custom_call.1} parent=11 // pred_region
          _
        $region32: #{tpu_custom_call.1} parent=11 // pred_fallthru
          _
      $region12: #{tpu_custom_call.1} parent=5 // pred_fallthru
        _
      %p218 = scmp.lt.s32.totalorder %s15, 2
      // Predicated region
      $region33: #{tpu_custom_call.1} parent=5 // pred_check
        %p219 = pneg %p218
      $region34: #{tpu_custom_call.1} parent=5 // pred_check_branch
        %221 = sbr.rel (%p219) target = $region36
      $region35: #{tpu_custom_call.1} parent=5 // pred_region
        // Predicated region
        $region37: #{tpu_custom_call.1} parent=35 // pred_check
          %p222 = pneg %p49
        $region38: #{tpu_custom_call.1} parent=35 // pred_check_branch
          %224 = sbr.rel (%p222) target = $region40
        $region39: #{tpu_custom_call.1} parent=35 // pred_region
          %s225 = smul.u32 8, %s23
          %p226 = scmp.lt.s32.totalorder %s22, 1
          %s227 = scalar_select %p226, %s22, 1
          %p228 = scmp.lt.s32.totalorder %s225, 7
          %s229 = scalar_select %p228, %s225, 7
          %s230 = smul.addr %s227, 8
          %s231 = sadd.s32 %s229, %s230
          %s232 = smul.addr %s231, 8
          %s233 = scalar_lea.vmem %s0, %s232
          %s234 = smul.u32 8, %s23
        $region40: #{tpu_custom_call.1} parent=35 // pred_fallthru
          _
      $region36: #{tpu_custom_call.1} parent=5 // pred_fallthru
        _
      %p235 = scmp.le.s32.totalorder 1, %s15
      %p236 = scmp.lt.s32.totalorder %s15, 3
      %p237 = pnand %p235, %p236
      %p238 = pneg %p237
      // Predicated region
      $region41: #{tpu_custom_call.1} parent=5 // pred_check
        _
      $region42: #{tpu_custom_call.1} parent=5 // pred_check_branch
        %240 = sbr.rel (%p237) target = $region44
      $region43: #{tpu_custom_call.1} parent=5 // pred_region
        %s241 = ssub.s32 %s15, 1
        %s242 = smul.u32 8, %s25
        %p243 = scmp.lt.s32.totalorder %s24, 1
        %s244 = scalar_select %p243, %s24, 1
        %p245 = scmp.lt.s32.totalorder %s242, 7
        %s246 = scalar_select %p245, %s242, 7
        %s247 = smul.addr %s244, 8
        %s248 = sadd.s32 %s246, %s247
        %s249 = smul.addr %s248, 8
        %s250 = scalar_lea.vmem %s0, %s249
        %p251 = pneg %p55
        %p252 = pneg %p52
        %p253 = pneg %p76
        %p254 = pneg %p73
        %p255 = pneg %p97
        %p256 = pneg %p94
        %p257 = pneg %p118
        %p258 = pneg %p115
        %p259 = pneg %p139
        %p260 = pneg %p136
        %p261 = pneg %p160
        %p262 = pneg %p157
        %p263 = pneg %p188
        %p264 = pneg %p185
        %s265 = sand.u32 %s175, 1
        %s266 = scalar_lea.sflag [#allocation3], %s265
        %s267 = sand.u32 %s175, 1
        %s268 = smul.addr %s267, 256
        %s269 = scalar_lea.vmem [#allocation2], %s268
        %s270 = smul.u32 8, %s25
        %p271 = scmp.lt.s32.totalorder %s24, 1
        %s272 = scalar_select %p271, %s24, 1
        %p273 = scmp.lt.s32.totalorder %s270, 7
        %s274 = scalar_select %p273, %s270, 7
        %s275 = smul.addr %s272, 8
        %s276 = sadd.s32 %s274, %s275
        %s277 = smul.addr %s276, 8
        %s278 = scalar_lea.vmem %s0, %s277
        %s279 = smul.u32 8, %s25
        %s280 = smul.u32 8, %s25
        %v281 = vld [vmem:[%s278] sm:$0xff]
        %v282 = vld [vmem:[%s278 + $0x8] sm:$0xff]
        %v283 = vld [vmem:[%s278 + $0x10] sm:$0xff]
        %v284 = vld [vmem:[%s278 + $0x18] sm:$0xff]
        %v285 = vld [vmem:[%s278 + $0x20] sm:$0xff]
        %v286 = vld [vmem:[%s278 + $0x28] sm:$0xff]
        %v287 = vld [vmem:[%s278 + $0x30] sm:$0xff]
        %v288 = vld [vmem:[%s278 + $0x38] sm:$0xff]
        %v289 = vld [vmem:[%s3] sm:$0xff]
        %v290 = vld [vmem:[%s3 + $0x8] sm:$0xff]
        %v291 = vld [vmem:[%s3 + $0x10] sm:$0xff]
        %v292 = vld [vmem:[%s3 + $0x18] sm:$0xff]
        %v293 = vld [vmem:[%s3 + $0x20] sm:$0xff]
        %v294 = vld [vmem:[%s3 + $0x28] sm:$0xff]
        %v295 = vld [vmem:[%s3 + $0x30] sm:$0xff]
        %v296 = vld [vmem:[%s3 + $0x38] sm:$0xff]
        %v297 = vld [vmem:[%s3 + $0x40] sm:$0xff]
        %v298 = vld [vmem:[%s3 + $0x48] sm:$0xff]
        %v299 = vld [vmem:[%s3 + $0x50] sm:$0xff]
        %v300 = vld [vmem:[%s3 + $0x58] sm:$0xff]
        %v301 = vld [vmem:[%s3 + $0x60] sm:$0xff]
        %v302 = vld [vmem:[%s3 + $0x68] sm:$0xff]
        %v303 = vld [vmem:[%s3 + $0x70] sm:$0xff]
        %v304 = vld [vmem:[%s3 + $0x78] sm:$0xff]
        %v305 = vld [vmem:[%s4] sm:$0xf]
        %v306 = vld [vmem:[%s5] sm:$0x1]
        %v307 = vld [vmem:[%s2] sm:$0xff]
        %v308 = vld [vmem:[%s2 + $0x8] sm:$0xff]
        %v309 = vld [vmem:[%s2 + $0x10] sm:$0xff]
        %v310 = vld [vmem:[%s2 + $0x18] sm:$0xff]
        %vm311 = vcmask 261120
        %v313 = vsel %vm311, %v281, 0
        %v316 = vsel %vm311, %v282, 0
        %v319 = vsel %vm311, %v283, 0
        %v322 = vsel %vm311, %v284, 0
        %v325 = vsel %vm311, %v285, 0
        %v328 = vsel %vm311, %v286, 0
        %v331 = vsel %vm311, %v287, 0
        %v334 = vsel %vm311, %v288, 0
        %336 = vmatprep.subr.mxu0 0.0
        %337 = vmatpush1.msra.mxu0 %v307
        %338 = vmatprep.subr.mxu0 0.0
        %339 = vmatpush1.msra.mxu0 %v308
        %340 = vmatprep.subr.mxu0 0.0
        %341 = vmatpush1.msra.mxu0 %v309
        %342 = vmatprep.subr.mxu0 0.0
        %343 = vmatpush1.msra.mxu0 %v310
        %344 = vmatprep.subr.mxu0 0.0
        %345 = vmatpush1.msra.mxu0 0.0
        %346 = vmatprep.subr.mxu0 0.0
        %347 = vmatpush1.msra.mxu0 0.0
        %348 = vmatprep.subr.mxu0 0.0
        %349 = vmatpush1.msra.mxu0 0.0
        %350 = vmatprep.subr.mxu0 0.0
        %351 = vmatpush1.msra.mxu0 0.0
        %352 = vmatprep.subr.mxu0 0.0
        %353 = vmatpush1.msra.mxu0 0.0
        %354 = vmatprep.subr.mxu0 0.0
        %355 = vmatpush1.msra.mxu0 0.0
        %356 = vmatprep.subr.mxu0 0.0
        %357 = vmatpush1.msra.mxu0 0.0
        %358 = vmatprep.subr.mxu0 0.0
        %359 = vmatpush1.msra.mxu0 0.0
        %360 = vmatprep.subr.mxu0 0.0
        %361 = vmatpush1.msra.mxu0 0.0
        %362 = vmatprep.subr.mxu0 0.0
        %363 = vmatpush1.msra.mxu0 0.0
        %364 = vmatprep.subr.mxu0 0.0
        %365 = vmatpush1.msra.mxu0 0.0
        %366 = vmatprep.subr.mxu0 0.0
        %367 = vmatpush1.msra.mxu0 0.0
        %368 = vmatprep.subr.mxu0 0.0
        %369 = vmatpush1.msra.mxu0 0.0
        %370 = vmatprep.subr.mxu0 0.0
        %371 = vmatpush1.msra.mxu0 0.0
        %372 = vmatprep.subr.mxu0 0.0
        %373 = vmatpush1.msra.mxu0 0.0
        %374 = vmatprep.subr.mxu0 0.0
        %375 = vmatpush1.msra.mxu0 0.0
        %376 = vmatprep.subr.mxu0 0.0
        %377 = vmatpush1.msra.mxu0 0.0
        %378 = vmatprep.subr.mxu0 0.0
        %379 = vmatpush1.msra.mxu0 0.0
        %380 = vmatprep.subr.mxu0 0.0
        %381 = vmatpush1.msra.mxu0 0.0
        %382 = vmatprep.subr.mxu0 0.0
        %383 = vmatpush1.msra.mxu0 0.0
        %384 = vmatprep.subr.mxu0 0.0
        %385 = vmatpush1.msra.mxu0 0.0
        %386 = vmatprep.subr.mxu0 0.0
        %387 = vmatpush1.msra.mxu0 0.0
        %388 = vmatprep.subr.mxu0 0.0
        %389 = vmatpush1.msra.mxu0 0.0
        %390 = vmatprep.subr.mxu0 0.0
        %391 = vmatpush1.msra.mxu0 0.0
        %392 = vmatprep.subr.mxu0 0.0
        %393 = vmatpush1.msra.mxu0 0.0
        %394 = vmatprep.subr.mxu0 0.0
        %395 = vmatpush1.msra.mxu0 0.0
        %396 = vmatprep.subr.mxu0 0.0
        %397 = vmatpush1.msra.mxu0 0.0
        %398 = vmatprep.subr.mxu0 0.0
        %399 = vmatpush1.msra.mxu0 0.0
        %400 = vmatprep.mubr.f32.mxu0 0.0
        %401 = vmatmul.mubr.f32.gmra.mrb[0].mxu0 %v313
        %v402 = vpop.f32.mrb[0].mxu0
        %v403 = vadd.f32 0.0, %v402
        %v404 = vpop.f32.mrb[0].mxu0
        %405 = vmatprep.mubr.f32.mxu0 0.0
        %406 = vmatmul.mubr.f32.gmra.mrb[0].mxu0 %v316
        %v407 = vpop.f32.mrb[0].mxu0
        %v408 = vadd.f32 0.0, %v407
        %v409 = vpop.f32.mrb[0].mxu0
        %410 = vmatprep.mubr.f32.mxu0 0.0
        %411 = vmatmul.mubr.f32.gmra.mrb[0].mxu0 %v319
        %v412 = vpop.f32.mrb[0].mxu0
        %v413 = vadd.f32 0.0, %v412
        %v414 = vpop.f32.mrb[0].mxu0
        %415 = vmatprep.mubr.f32.mxu0 0.0
        %416 = vmatmul.mubr.f32.gmra.mrb[0].mxu0 %v322
        %v417 = vpop.f32.mrb[0].mxu0
        %v418 = vadd.f32 0.0, %v417
        %v419 = vpop.f32.mrb[0].mxu0
        %420 = vmatprep.mubr.f32.mxu0 0.0
        %421 = vmatmul.mubr.f32.gmra.mrb[0].mxu0 %v325
        %v422 = vpop.f32.mrb[0].mxu0
        %v423 = vadd.f32 0.0, %v422
        %v424 = vpop.f32.mrb[0].mxu0
        %425 = vmatprep.mubr.f32.mxu0 0.0
        %426 = vmatmul.mubr.f32.gmra.mrb[0].mxu0 %v328
        %v427 = vpop.f32.mrb[0].mxu0
        %v428 = vadd.f32 0.0, %v427
        %v429 = vpop.f32.mrb[0].mxu0
        %430 = vmatprep.mubr.f32.mxu0 0.0
        %431 = vmatmul.mubr.f32.gmra.mrb[0].mxu0 %v331
        %v432 = vpop.f32.mrb[0].mxu0
        %v433 = vadd.f32 0.0, %v432
        %v434 = vpop.f32.mrb[0].mxu0
        %435 = vmatprep.mubr.f32.mxu0 0.0
        %436 = vmatmul.mubr.f32.gmra.mrb[0].mxu0 %v334
        %v437 = vpop.f32.mrb[0].mxu0
        %v438 = vadd.f32 0.0, %v437
        %v439 = vpop.f32.mrb[0].mxu0
        %440 = vdwg.mxu0
        %v441 = vld [vmem:[%s1] sm:$0xff]
        %v442 = vld [vmem:[%s1 + $0x20] sm:$0xff]
        %v443 = vld [vmem:[%s1 + $0x40] sm:$0xff]
        %v444 = vld [vmem:[%s1 + $0x60] sm:$0xff]
        %445 = vmatprep.subr.mxu0 0.0
        %446 = vmatpush1.msra.mxu0 %v441
        %447 = vmatprep.subr.mxu0 0.0
        %448 = vmatpush1.msra.mxu0 %v442
        %449 = vmatprep.subr.mxu0 0.0
        %450 = vmatpush1.msra.mxu0 %v443
        %451 = vmatprep.subr.mxu0 0.0
        %452 = vmatpush1.msra.mxu0 %v444
        %453 = vmatprep.subr.mxu0 0.0
        %454 = vmatpush1.msra.mxu0 0.0
        %455 = vmatprep.subr.mxu0 0.0
        %456 = vmatpush1.msra.mxu0 0.0
        %457 = vmatprep.subr.mxu0 0.0
        %458 = vmatpush1.msra.mxu0 0.0
        %459 = vmatprep.subr.mxu0 0.0
        %460 = vmatpush1.msra.mxu0 0.0
        %461 = vmatprep.subr.mxu0 0.0
        %462 = vmatpush1.msra.mxu0 0.0
        %463 = vmatprep.subr.mxu0 0.0
        %464 = vmatpush1.msra.mxu0 0.0
        %465 = vmatprep.subr.mxu0 0.0
        %466 = vmatpush1.msra.mxu0 0.0
        %467 = vmatprep.subr.mxu0 0.0
        %468 = vmatpush1.msra.mxu0 0.0
        %469 = vmatprep.subr.mxu0 0.0
        %470 = vmatpush1.msra.mxu0 0.0
        %471 = vmatprep.subr.mxu0 0.0
        %472 = vmatpush1.msra.mxu0 0.0
        %473 = vmatprep.subr.mxu0 0.0
        %474 = vmatpush1.msra.mxu0 0.0
        %475 = vmatprep.subr.mxu0 0.0
        %476 = vmatpush1.msra.mxu0 0.0
        %477 = vmatprep.subr.mxu0 0.0
        %478 = vmatpush1.msra.mxu0 0.0
        %479 = vmatprep.subr.mxu0 0.0
        %480 = vmatpush1.msra.mxu0 0.0
        %481 = vmatprep.subr.mxu0 0.0
        %482 = vmatpush1.msra.mxu0 0.0
        %483 = vmatprep.subr.mxu0 0.0
        %484 = vmatpush1.msra.mxu0 0.0
        %485 = vmatprep.subr.mxu0 0.0
        %486 = vmatpush1.msra.mxu0 0.0
        %487 = vmatprep.subr.mxu0 0.0
        %488 = vmatpush1.msra.mxu0 0.0
        %489 = vmatprep.subr.mxu0 0.0
        %490 = vmatpush1.msra.mxu0 0.0
        %491 = vmatprep.subr.mxu0 0.0
        %492 = vmatpush1.msra.mxu0 0.0
        %493 = vmatprep.subr.mxu0 0.0
        %494 = vmatpush1.msra.mxu0 0.0
        %495 = vmatprep.subr.mxu0 0.0
        %496 = vmatpush1.msra.mxu0 0.0
        %497 = vmatprep.subr.mxu0 0.0
        %498 = vmatpush1.msra.mxu0 0.0
        %499 = vmatprep.subr.mxu0 0.0
        %500 = vmatpush1.msra.mxu0 0.0
        %501 = vmatprep.subr.mxu0 0.0
        %502 = vmatpush1.msra.mxu0 0.0
        %503 = vmatprep.subr.mxu0 0.0
        %504 = vmatpush1.msra.mxu0 0.0
        %505 = vmatprep.subr.mxu0 0.0
        %506 = vmatpush1.msra.mxu0 0.0
        %507 = vmatprep.subr.mxu0 0.0
        %508 = vmatpush1.msra.mxu0 0.0
        %509 = vmatprep.mubr.f32.mxu0 0.0
        %510 = vmatmul.mubr.f32.gmra.mrb[0].mxu0 %v313
        %v511 = vpop.f32.mrb[0].mxu0
        %v512 = vadd.f32 0.0, %v511
        %v513 = vpop.f32.mrb[0].mxu0
        %514 = vmatprep.mubr.f32.mxu0 0.0
        %515 = vmatmul.mubr.f32.gmra.mrb[0].mxu0 %v316
        %v516 = vpop.f32.mrb[0].mxu0
        %v517 = vadd.f32 0.0, %v516
        %v518 = vpop.f32.mrb[0].mxu0
        %519 = vmatprep.mubr.f32.mxu0 0.0
        %520 = vmatmul.mubr.f32.gmra.mrb[0].mxu0 %v319
        %v521 = vpop.f32.mrb[0].mxu0
        %v522 = vadd.f32 0.0, %v521
        %v523 = vpop.f32.mrb[0].mxu0
        %524 = vmatprep.mubr.f32.mxu0 0.0
        %525 = vmatmul.mubr.f32.gmra.mrb[0].mxu0 %v322
        %v526 = vpop.f32.mrb[0].mxu0
        %v527 = vadd.f32 0.0, %v526
        %v528 = vpop.f32.mrb[0].mxu0
        %529 = vmatprep.mubr.f32.mxu0 0.0
        %530 = vmatmul.mubr.f32.gmra.mrb[0].mxu0 %v325
        %v531 = vpop.f32.mrb[0].mxu0
        %v532 = vadd.f32 0.0, %v531
        %v533 = vpop.f32.mrb[0].mxu0
        %534 = vmatprep.mubr.f32.mxu0 0.0
        %535 = vmatmul.mubr.f32.gmra.mrb[0].mxu0 %v328
        %v536 = vpop.f32.mrb[0].mxu0
        %v537 = vadd.f32 0.0, %v536
        %v538 = vpop.f32.mrb[0].mxu0
        %539 = vmatprep.mubr.f32.mxu0 0.0
        %540 = vmatmul.mubr.f32.gmra.mrb[0].mxu0 %v331
        %v541 = vpop.f32.mrb[0].mxu0
        %v542 = vadd.f32 0.0, %v541
        %v543 = vpop.f32.mrb[0].mxu0
        %544 = vmatprep.mubr.f32.mxu0 0.0
        %545 = vmatmul.mubr.f32.gmra.mrb[0].mxu0 %v334
        %v546 = vpop.f32.mrb[0].mxu0
        %v547 = vadd.f32 0.0, %v546
        %v548 = vpop.f32.mrb[0].mxu0
        %549 = vdwg.mxu0
        %v550 = vmul.f32 %v512, %v512
        %v551 = vmul.f32 %v517, %v517
        %v552 = vmul.f32 %v522, %v522
        %v553 = vmul.f32 %v527, %v527
        %v554 = vmul.f32 %v532, %v532
        %v555 = vmul.f32 %v537, %v537
        %v556 = vmul.f32 %v542, %v542
        %v557 = vmul.f32 %v547, %v547
        %558 = vmatprep.subr.mxu0 0.0
        %559 = vmatpush1.msra.mxu0 %v289
        %560 = vmatprep.subr.mxu0 0.0
        %561 = vmatpush1.msra.mxu0 %v290
        %562 = vmatprep.subr.mxu0 0.0
        %563 = vmatpush1.msra.mxu0 %v291
        %564 = vmatprep.subr.mxu0 0.0
        %565 = vmatpush1.msra.mxu0 %v292
        %566 = vmatprep.subr.mxu0 0.0
        %567 = vmatpush1.msra.mxu0 %v293
        %568 = vmatprep.subr.mxu0 0.0
        %569 = vmatpush1.msra.mxu0 %v294
        %570 = vmatprep.subr.mxu0 0.0
        %571 = vmatpush1.msra.mxu0 %v295
        %572 = vmatprep.subr.mxu0 0.0
        %573 = vmatpush1.msra.mxu0 %v296
        %574 = vmatprep.subr.mxu0 0.0
        %575 = vmatpush1.msra.mxu0 %v297
        %576 = vmatprep.subr.mxu0 0.0
        %577 = vmatpush1.msra.mxu0 %v298
        %578 = vmatprep.subr.mxu0 0.0
        %579 = vmatpush1.msra.mxu0 %v299
        %580 = vmatprep.subr.mxu0 0.0
        %581 = vmatpush1.msra.mxu0 %v300
        %582 = vmatprep.subr.mxu0 0.0
        %583 = vmatpush1.msra.mxu0 %v301
        %584 = vmatprep.subr.mxu0 0.0
        %585 = vmatpush1.msra.mxu0 %v302
        %586 = vmatprep.subr.mxu0 0.0
        %587 = vmatpush1.msra.mxu0 %v303
        %588 = vmatprep.subr.mxu0 0.0
        %589 = vmatpush1.msra.mxu0 %v304
        %590 = vmatprep.subr.mxu0 0.0
        %591 = vmatpush1.msra.mxu0 0.0
        %592 = vmatprep.subr.mxu0 0.0
        %593 = vmatpush1.msra.mxu0 0.0
        %594 = vmatprep.subr.mxu0 0.0
        %595 = vmatpush1.msra.mxu0 0.0
        %596 = vmatprep.subr.mxu0 0.0
        %597 = vmatpush1.msra.mxu0 0.0
        %598 = vmatprep.subr.mxu0 0.0
        %599 = vmatpush1.msra.mxu0 0.0
        %600 = vmatprep.subr.mxu0 0.0
        %601 = vmatpush1.msra.mxu0 0.0
        %602 = vmatprep.subr.mxu0 0.0
        %603 = vmatpush1.msra.mxu0 0.0
        %604 = vmatprep.subr.mxu0 0.0
        %605 = vmatpush1.msra.mxu0 0.0
        %606 = vmatprep.subr.mxu0 0.0
        %607 = vmatpush1.msra.mxu0 0.0
        %608 = vmatprep.subr.mxu0 0.0
        %609 = vmatpush1.msra.mxu0 0.0
        %610 = vmatprep.subr.mxu0 0.0
        %611 = vmatpush1.msra.mxu0 0.0
        %612 = vmatprep.subr.mxu0 0.0
        %613 = vmatpush1.msra.mxu0 0.0
        %614 = vmatprep.subr.mxu0 0.0
        %615 = vmatpush1.msra.mxu0 0.0
        %616 = vmatprep.subr.mxu0 0.0
        %617 = vmatpush1.msra.mxu0 0.0
        %618 = vmatprep.subr.mxu0 0.0
        %619 = vmatpush1.msra.mxu0 0.0
        %620 = vmatprep.subr.mxu0 0.0
        %621 = vmatpush1.msra.mxu0 0.0
        %622 = vmatprep.mubr.f32.mxu0 0.0
        %623 = vmatmul.mubr.f32.gmra.mrb[0].mxu0 %v550
        %v624 = vpop.f32.mrb[0].mxu0
        %v625 = vadd.f32 0.0, %v624
        %v626 = vpop.f32.mrb[0].mxu0
        %627 = vmatprep.mubr.f32.mxu0 0.0
        %628 = vmatmul.mubr.f32.gmra.mrb[0].mxu0 %v551
        %v629 = vpop.f32.mrb[0].mxu0
        %v630 = vadd.f32 0.0, %v629
        %v631 = vpop.f32.mrb[0].mxu0
        %632 = vmatprep.mubr.f32.mxu0 0.0
        %633 = vmatmul.mubr.f32.gmra.mrb[0].mxu0 %v552
        %v634 = vpop.f32.mrb[0].mxu0
        %v635 = vadd.f32 0.0, %v634
        %v636 = vpop.f32.mrb[0].mxu0
        %637 = vmatprep.mubr.f32.mxu0 0.0
        %638 = vmatmul.mubr.f32.gmra.mrb[0].mxu0 %v553
        %v639 = vpop.f32.mrb[0].mxu0
        %v640 = vadd.f32 0.0, %v639
        %v641 = vpop.f32.mrb[0].mxu0
        %642 = vmatprep.mubr.f32.mxu0 0.0
        %643 = vmatmul.mubr.f32.gmra.mrb[0].mxu0 %v554
        %v644 = vpop.f32.mrb[0].mxu0
        %v645 = vadd.f32 0.0, %v644
        %v646 = vpop.f32.mrb[0].mxu0
        %647 = vmatprep.mubr.f32.mxu0 0.0
        %648 = vmatmul.mubr.f32.gmra.mrb[0].mxu0 %v555
        %v649 = vpop.f32.mrb[0].mxu0
        %v650 = vadd.f32 0.0, %v649
        %v651 = vpop.f32.mrb[0].mxu0
        %652 = vmatprep.mubr.f32.mxu0 0.0
        %653 = vmatmul.mubr.f32.gmra.mrb[0].mxu0 %v556
        %v654 = vpop.f32.mrb[0].mxu0
        %v655 = vadd.f32 0.0, %v654
        %v656 = vpop.f32.mrb[0].mxu0
        %657 = vmatprep.mubr.f32.mxu0 0.0
        %658 = vmatmul.mubr.f32.gmra.mrb[0].mxu0 %v557
        %v659 = vpop.f32.mrb[0].mxu0
        %v660 = vadd.f32 0.0, %v659
        %v661 = vpop.f32.mrb[0].mxu0
        %662 = vdwg.mxu0
        %v663 = vmul.f32 %v625, 0.03125
        %v664 = vmul.f32 %v630, 0.03125
        %v665 = vmul.f32 %v635, 0.03125
        %v666 = vmul.f32 %v640, 0.03125
        %v667 = vmul.f32 %v645, 0.03125
        %v668 = vmul.f32 %v650, 0.03125
        %v669 = vmul.f32 %v655, 0.03125
        %v670 = vmul.f32 %v660, 0.03125
        %v671 = vmul.f32 %v403, %v403
        %v672 = vmul.f32 %v408, %v408
        %v673 = vmul.f32 %v413, %v413
        %v674 = vmul.f32 %v418, %v418
        %v675 = vmul.f32 %v423, %v423
        %v676 = vmul.f32 %v428, %v428
        %v677 = vmul.f32 %v433, %v433
        %v678 = vmul.f32 %v438, %v438
        %v679 = vsub.f32 %v663, %v671
        %v680 = vsub.f32 %v664, %v672
        %v681 = vsub.f32 %v665, %v673
        %v682 = vsub.f32 %v666, %v674
        %v683 = vsub.f32 %v667, %v675
        %v684 = vsub.f32 %v668, %v676
        %v685 = vsub.f32 %v669, %v677
        %v686 = vsub.f32 %v670, %v678
        %v687 = vadd.f32 %v679, 1e-05
        %v688 = vadd.f32 %v680, 1e-05
        %v689 = vadd.f32 %v681, 1e-05
        %v690 = vadd.f32 %v682, 1e-05
        %v691 = vadd.f32 %v683, 1e-05
        %v692 = vadd.f32 %v684, 1e-05
        %v693 = vadd.f32 %v685, 1e-05
        %v694 = vadd.f32 %v686, 1e-05
        %v695 = vrsqrt.pop %v687
        %v696 = vrsqrt.pop %v688
        %v697 = vrsqrt.pop %v689
        %v698 = vrsqrt.pop %v690
        %v699 = vrsqrt.pop %v691
        %v700 = vrsqrt.pop %v692
        %v701 = vrsqrt.pop %v693
        %v702 = vrsqrt.pop %v694
        %vm703 = vcmask 31744
        %v705 = vsel %vm703, %v695, 0
        %v708 = vsel %vm703, %v696, 0
        %v711 = vsel %vm703, %v697, 0
        %v714 = vsel %vm703, %v698, 0
        %v717 = vsel %vm703, %v699, 0
        %v720 = vsel %vm703, %v700, 0
        %v723 = vsel %vm703, %v701, 0
        %v726 = vsel %vm703, %v702, 0
        %vm728 = vcmask 1043456
        %v730 = vsel %vm728, %v305, 0
        %732 = vmatprep.subr.mxu0 0.0
        %733 = vmatpush1.msra.mxu0 %v730
        %734 = vmatprep.subr.mxu0 0.0
        %735 = vmatpush1.msra.mxu0 0.0
        %736 = vmatprep.subr.mxu0 0.0
        %737 = vmatpush1.msra.mxu0 0.0
        %738 = vmatprep.subr.mxu0 0.0
        %739 = vmatpush1.msra.mxu0 0.0
        %740 = vmatprep.subr.mxu0 0.0
        %741 = vmatpush1.msra.mxu0 0.0
        %742 = vmatprep.subr.mxu0 0.0
        %743 = vmatpush1.msra.mxu0 0.0
        %744 = vmatprep.subr.mxu0 0.0
        %745 = vmatpush1.msra.mxu0 0.0
        %746 = vmatprep.subr.mxu0 0.0
        %747 = vmatpush1.msra.mxu0 0.0
        %748 = vmatprep.subr.mxu0 0.0
        %749 = vmatpush1.msra.mxu0 0.0
        %750 = vmatprep.subr.mxu0 0.0
        %751 = vmatpush1.msra.mxu0 0.0
        %752 = vmatprep.subr.mxu0 0.0
        %753 = vmatpush1.msra.mxu0 0.0
        %754 = vmatprep.subr.mxu0 0.0
        %755 = vmatpush1.msra.mxu0 0.0
        %756 = vmatprep.subr.mxu0 0.0
        %757 = vmatpush1.msra.mxu0 0.0
        %758 = vmatprep.subr.mxu0 0.0
        %759 = vmatpush1.msra.mxu0 0.0
        %760 = vmatprep.subr.mxu0 0.0
        %761 = vmatpush1.msra.mxu0 0.0
        %762 = vmatprep.subr.mxu0 0.0
        %763 = vmatpush1.msra.mxu0 0.0
        %764 = vmatprep.subr.mxu0 0.0
        %765 = vmatpush1.msra.mxu0 0.0
        %766 = vmatprep.subr.mxu0 0.0
        %767 = vmatpush1.msra.mxu0 0.0
        %768 = vmatprep.subr.mxu0 0.0
        %769 = vmatpush1.msra.mxu0 0.0
        %770 = vmatprep.subr.mxu0 0.0
        %771 = vmatpush1.msra.mxu0 0.0
        %772 = vmatprep.subr.mxu0 0.0
        %773 = vmatpush1.msra.mxu0 0.0
        %774 = vmatprep.subr.mxu0 0.0
        %775 = vmatpush1.msra.mxu0 0.0
        %776 = vmatprep.subr.mxu0 0.0
        %777 = vmatpush1.msra.mxu0 0.0
        %778 = vmatprep.subr.mxu0 0.0
        %779 = vmatpush1.msra.mxu0 0.0
        %780 = vmatprep.subr.mxu0 0.0
        %781 = vmatpush1.msra.mxu0 0.0
        %782 = vmatprep.subr.mxu0 0.0
        %783 = vmatpush1.msra.mxu0 0.0
        %784 = vmatprep.subr.mxu0 0.0
        %785 = vmatpush1.msra.mxu0 0.0
        %786 = vmatprep.subr.mxu0 0.0
        %787 = vmatpush1.msra.mxu0 0.0
        %788 = vmatprep.subr.mxu0 0.0
        %789 = vmatpush1.msra.mxu0 0.0
        %790 = vmatprep.subr.mxu0 0.0
        %791 = vmatpush1.msra.mxu0 0.0
        %792 = vmatprep.subr.mxu0 0.0
        %793 = vmatpush1.msra.mxu0 0.0
        %794 = vmatprep.subr.mxu0 0.0
        %795 = vmatpush1.msra.mxu0 0.0
        %796 = vmatprep.mubr.f32.mxu0 0.0
        %797 = vmatmul.mubr.f32.gmra.mrb[0].mxu0 %v705
        %v798 = vpop.f32.mrb[0].mxu0
        %v799 = vadd.f32 0.0, %v798
        %v800 = vpop.f32.mrb[0].mxu0
        %801 = vmatprep.mubr.f32.mxu0 0.0
        %802 = vmatmul.mubr.f32.gmra.mrb[0].mxu0 %v708
        %v803 = vpop.f32.mrb[0].mxu0
        %v804 = vadd.f32 0.0, %v803
        %v805 = vpop.f32.mrb[0].mxu0
        %806 = vmatprep.mubr.f32.mxu0 0.0
        %807 = vmatmul.mubr.f32.gmra.mrb[0].mxu0 %v711
        %v808 = vpop.f32.mrb[0].mxu0
        %v809 = vadd.f32 0.0, %v808
        %v810 = vpop.f32.mrb[0].mxu0
        %811 = vmatprep.mubr.f32.mxu0 0.0
        %812 = vmatmul.mubr.f32.gmra.mrb[0].mxu0 %v714
        %v813 = vpop.f32.mrb[0].mxu0
        %v814 = vadd.f32 0.0, %v813
        %v815 = vpop.f32.mrb[0].mxu0
        %816 = vmatprep.mubr.f32.mxu0 0.0
        %817 = vmatmul.mubr.f32.gmra.mrb[0].mxu0 %v717
        %v818 = vpop.f32.mrb[0].mxu0
        %v819 = vadd.f32 0.0, %v818
        %v820 = vpop.f32.mrb[0].mxu0
        %821 = vmatprep.mubr.f32.mxu0 0.0
        %822 = vmatmul.mubr.f32.gmra.mrb[0].mxu0 %v720
        %v823 = vpop.f32.mrb[0].mxu0
        %v824 = vadd.f32 0.0, %v823
        %v825 = vpop.f32.mrb[0].mxu0
        %826 = vmatprep.mubr.f32.mxu0 0.0
        %827 = vmatmul.mubr.f32.gmra.mrb[0].mxu0 %v723
        %v828 = vpop.f32.mrb[0].mxu0
        %v829 = vadd.f32 0.0, %v828
        %v830 = vpop.f32.mrb[0].mxu0
        %831 = vmatprep.mubr.f32.mxu0 0.0
        %832 = vmatmul.mubr.f32.gmra.mrb[0].mxu0 %v726
        %v833 = vpop.f32.mrb[0].mxu0
        %v834 = vadd.f32 0.0, %v833
        %v835 = vpop.f32.mrb[0].mxu0
        %836 = vdwg.mxu0
        %v837 = vmul.f32 %v403, %v695
        %v838 = vmul.f32 %v408, %v696
        %v839 = vmul.f32 %v413, %v697
        %v840 = vmul.f32 %v418, %v698
        %v841 = vmul.f32 %v423, %v699
        %v842 = vmul.f32 %v428, %v700
        %v843 = vmul.f32 %v433, %v701
        %v844 = vmul.f32 %v438, %v702
        %v846 = vsel %vm703, %v837, 0
        %v849 = vsel %vm703, %v838, 0
        %v852 = vsel %vm703, %v839, 0
        %v855 = vsel %vm703, %v840, 0
        %v858 = vsel %vm703, %v841, 0
        %v861 = vsel %vm703, %v842, 0
        %v864 = vsel %vm703, %v843, 0
        %v867 = vsel %vm703, %v844, 0
        %869 = vmatprep.subr.mxu0 0.0
        %870 = vmatpush1.msra.mxu0 %v730
        %871 = vmatprep.subr.mxu0 0.0
        %872 = vmatpush1.msra.mxu0 0.0
        %873 = vmatprep.subr.mxu0 0.0
        %874 = vmatpush1.msra.mxu0 0.0
        %875 = vmatprep.subr.mxu0 0.0
        %876 = vmatpush1.msra.mxu0 0.0
        %877 = vmatprep.subr.mxu0 0.0
        %878 = vmatpush1.msra.mxu0 0.0
        %879 = vmatprep.subr.mxu0 0.0
        %880 = vmatpush1.msra.mxu0 0.0
        %881 = vmatprep.subr.mxu0 0.0
        %882 = vmatpush1.msra.mxu0 0.0
        %883 = vmatprep.subr.mxu0 0.0
        %884 = vmatpush1.msra.mxu0 0.0
        %885 = vmatprep.subr.mxu0 0.0
        %886 = vmatpush1.msra.mxu0 0.0
        %887 = vmatprep.subr.mxu0 0.0
        %888 = vmatpush1.msra.mxu0 0.0
        %889 = vmatprep.subr.mxu0 0.0
        %890 = vmatpush1.msra.mxu0 0.0
        %891 = vmatprep.subr.mxu0 0.0
        %892 = vmatpush1.msra.mxu0 0.0
        %893 = vmatprep.subr.mxu0 0.0
        %894 = vmatpush1.msra.mxu0 0.0
        %895 = vmatprep.subr.mxu0 0.0
        %896 = vmatpush1.msra.mxu0 0.0
        %897 = vmatprep.subr.mxu0 0.0
        %898 = vmatpush1.msra.mxu0 0.0
        %899 = vmatprep.subr.mxu0 0.0
        %900 = vmatpush1.msra.mxu0 0.0
        %901 = vmatprep.subr.mxu0 0.0
        %902 = vmatpush1.msra.mxu0 0.0
        %903 = vmatprep.subr.mxu0 0.0
        %904 = vmatpush1.msra.mxu0 0.0
        %905 = vmatprep.subr.mxu0 0.0
        %906 = vmatpush1.msra.mxu0 0.0
        %907 = vmatprep.subr.mxu0 0.0
        %908 = vmatpush1.msra.mxu0 0.0
        %909 = vmatprep.subr.mxu0 0.0
        %910 = vmatpush1.msra.mxu0 0.0
        %911 = vmatprep.subr.mxu0 0.0
        %912 = vmatpush1.msra.mxu0 0.0
        %913 = vmatprep.subr.mxu0 0.0
        %914 = vmatpush1.msra.mxu0 0.0
        %915 = vmatprep.subr.mxu0 0.0
        %916 = vmatpush1.msra.mxu0 0.0
        %917 = vmatprep.subr.mxu0 0.0
        %918 = vmatpush1.msra.mxu0 0.0
        %919 = vmatprep.subr.mxu0 0.0
        %920 = vmatpush1.msra.mxu0 0.0
        %921 = vmatprep.subr.mxu0 0.0
        %922 = vmatpush1.msra.mxu0 0.0
        %923 = vmatprep.subr.mxu0 0.0
        %924 = vmatpush1.msra.mxu0 0.0
        %925 = vmatprep.subr.mxu0 0.0
        %926 = vmatpush1.msra.mxu0 0.0
        %927 = vmatprep.subr.mxu0 0.0
        %928 = vmatpush1.msra.mxu0 0.0
        %929 = vmatprep.subr.mxu0 0.0
        %930 = vmatpush1.msra.mxu0 0.0
        %931 = vmatprep.subr.mxu0 0.0
        %932 = vmatpush1.msra.mxu0 0.0
        %933 = vmatprep.mubr.f32.mxu0 0.0
        %934 = vmatmul.mubr.f32.gmra.mrb[0].mxu0 %v846
        %v935 = vpop.f32.mrb[0].mxu0
        %v936 = vadd.f32 0.0, %v935
        %v937 = vpop.f32.mrb[0].mxu0
        %938 = vmatprep.mubr.f32.mxu0 0.0
        %939 = vmatmul.mubr.f32.gmra.mrb[0].mxu0 %v849
        %v940 = vpop.f32.mrb[0].mxu0
        %v941 = vadd.f32 0.0, %v940
        %v942 = vpop.f32.mrb[0].mxu0
        %943 = vmatprep.mubr.f32.mxu0 0.0
        %944 = vmatmul.mubr.f32.gmra.mrb[0].mxu0 %v852
        %v945 = vpop.f32.mrb[0].mxu0
        %v946 = vadd.f32 0.0, %v945
        %v947 = vpop.f32.mrb[0].mxu0
        %948 = vmatprep.mubr.f32.mxu0 0.0
        %949 = vmatmul.mubr.f32.gmra.mrb[0].mxu0 %v855
        %v950 = vpop.f32.mrb[0].mxu0
        %v951 = vadd.f32 0.0, %v950
        %v952 = vpop.f32.mrb[0].mxu0
        %953 = vmatprep.mubr.f32.mxu0 0.0
        %954 = vmatmul.mubr.f32.gmra.mrb[0].mxu0 %v858
        %v955 = vpop.f32.mrb[0].mxu0
        %v956 = vadd.f32 0.0, %v955
        %v957 = vpop.f32.mrb[0].mxu0
        %958 = vmatprep.mubr.f32.mxu0 0.0
        %959 = vmatmul.mubr.f32.gmra.mrb[0].mxu0 %v861
        %v960 = vpop.f32.mrb[0].mxu0
        %v961 = vadd.f32 0.0, %v960
        %v962 = vpop.f32.mrb[0].mxu0
        %963 = vmatprep.mubr.f32.mxu0 0.0
        %964 = vmatmul.mubr.f32.gmra.mrb[0].mxu0 %v864
        %v965 = vpop.f32.mrb[0].mxu0
        %v966 = vadd.f32 0.0, %v965
        %v967 = vpop.f32.mrb[0].mxu0
        %968 = vmatprep.mubr.f32.mxu0 0.0
        %969 = vmatmul.mubr.f32.gmra.mrb[0].mxu0 %v867
        %v970 = vpop.f32.mrb[0].mxu0
        %v971 = vadd.f32 0.0, %v970
        %v972 = vpop.f32.mrb[0].mxu0
        %973 = vdwg.mxu0
        %v975 = vlaneseq
        %v976 = vshrl.u32 %v975, 7
        %v977 = vsub.s32 0, %v976
        %v978 = vrot.slane %v306, %v977
        %v980 = vsub.f32 %v978, %v936
        %v981 = vsub.f32 %v978, %v941
        %v982 = vsub.f32 %v978, %v946
        %v983 = vsub.f32 %v978, %v951
        %v984 = vsub.f32 %v978, %v956
        %v985 = vsub.f32 %v978, %v961
        %v986 = vsub.f32 %v978, %v966
        %v987 = vsub.f32 %v978, %v971
        %v988 = vmul.f32 %v512, %v799
        %v989 = vmul.f32 %v517, %v804
        %v990 = vmul.f32 %v522, %v809
        %v991 = vmul.f32 %v527, %v814
        %v992 = vmul.f32 %v532, %v819
        %v993 = vmul.f32 %v537, %v824
        %v994 = vmul.f32 %v542, %v829
        %v995 = vmul.f32 %v547, %v834
        %v996 = vadd.f32 %v988, %v980
        %v997 = vadd.f32 %v989, %v981
        %v998 = vadd.f32 %v990, %v982
        %v999 = vadd.f32 %v991, %v983
        %v1000 = vadd.f32 %v992, %v984
        %v1001 = vadd.f32 %v993, %v985
        %v1002 = vadd.f32 %v994, %v986
        %v1003 = vadd.f32 %v995, %v987
        %1004 = vst [vmem:[%s269] sm:$0xff] %v996
        %1005 = vst [vmem:[%s269 + $0x20] sm:$0xff] %v997
        %1006 = vst [vmem:[%s269 + $0x40] sm:$0xff] %v998
        %1007 = vst [vmem:[%s269 + $0x60] sm:$0xff] %v999
        %1008 = vst [vmem:[%s269 + $0x80] sm:$0xff] %v1000
        %1009 = vst [vmem:[%s269 + $0xa0] sm:$0xff] %v1001
        %1010 = vst [vmem:[%s269 + $0xc0] sm:$0xff] %v1002
        %1011 = vst [vmem:[%s269 + $0xe0] sm:$0xff] %v1003
        %v1012 = vld [vmem:[%s1 + $0x8] sm:$0xff]
        %v1013 = vld [vmem:[%s1 + $0x28] sm:$0xff]
        %v1014 = vld [vmem:[%s1 + $0x48] sm:$0xff]
        %v1015 = vld [vmem:[%s1 + $0x68] sm:$0xff]
        %1016 = vmatprep.subr.mxu0 0.0
        %1017 = vmatpush1.msra.mxu0 %v1012
        %1018 = vmatprep.subr.mxu0 0.0
        %1019 = vmatpush1.msra.mxu0 %v1013
        %1020 = vmatprep.subr.mxu0 0.0
        %1021 = vmatpush1.msra.mxu0 %v1014
        %1022 = vmatprep.subr.mxu0 0.0
        %1023 = vmatpush1.msra.mxu0 %v1015
        %1024 = vmatprep.subr.mxu0 0.0
        %1025 = vmatpush1.msra.mxu0 0.0
        %1026 = vmatprep.subr.mxu0 0.0
        %1027 = vmatpush1.msra.mxu0 0.0
        %1028 = vmatprep.subr.mxu0 0.0
        %1029 = vmatpush1.msra.mxu0 0.0
        %1030 = vmatprep.subr.mxu0 0.0
        %1031 = vmatpush1.msra.mxu0 0.0
        %1032 = vmatprep.subr.mxu0 0.0
        %1033 = vmatpush1.msra.mxu0 0.0
        %1034 = vmatprep.subr.mxu0 0.0
        %1035 = vmatpush1.msra.mxu0 0.0
        %1036 = vmatprep.subr.mxu0 0.0
        %1037 = vmatpush1.msra.mxu0 0.0
        %1038 = vmatprep.subr.mxu0 0.0
        %1039 = vmatpush1.msra.mxu0 0.0
        %1040 = vmatprep.subr.mxu0 0.0
        %1041 = vmatpush1.msra.mxu0 0.0
        %1042 = vmatprep.subr.mxu0 0.0
        %1043 = vmatpush1.msra.mxu0 0.0
        %1044 = vmatprep.subr.mxu0 0.0
        %1045 = vmatpush1.msra.mxu0 0.0
        %1046 = vmatprep.subr.mxu0 0.0
        %1047 = vmatpush1.msra.mxu0 0.0
        %1048 = vmatprep.subr.mxu0 0.0
        %1049 = vmatpush1.msra.mxu0 0.0
        %1050 = vmatprep.subr.mxu0 0.0
        %1051 = vmatpush1.msra.mxu0 0.0
        %1052 = vmatprep.subr.mxu0 0.0
        %1053 = vmatpush1.msra.mxu0 0.0
        %1054 = vmatprep.subr.mxu0 0.0
        %1055 = vmatpush1.msra.mxu0 0.0
        %1056 = vmatprep.subr.mxu0 0.0
        %1057 = vmatpush1.msra.mxu0 0.0
        %1058 = vmatprep.subr.mxu0 0.0
        %1059 = vmatpush1.msra.mxu0 0.0
        %1060 = vmatprep.subr.mxu0 0.0
        %1061 = vmatpush1.msra.mxu0 0.0
        %1062 = vmatprep.subr.mxu0 0.0
        %1063 = vmatpush1.msra.mxu0 0.0
        %1064 = vmatprep.subr.mxu0 0.0
        %1065 = vmatpush1.msra.mxu0 0.0
        %1066 = vmatprep.subr.mxu0 0.0
        %1067 = vmatpush1.msra.mxu0 0.0
        %1068 = vmatprep.subr.mxu0 0.0
        %1069 = vmatpush1.msra.mxu0 0.0
        %1070 = vmatprep.subr.mxu0 0.0
        %1071 = vmatpush1.msra.mxu0 0.0
        %1072 = vmatprep.subr.mxu0 0.0
        %1073 = vmatpush1.msra.mxu0 0.0
        %1074 = vmatprep.subr.mxu0 0.0
        %1075 = vmatpush1.msra.mxu0 0.0
        %1076 = vmatprep.subr.mxu0 0.0
        %1077 = vmatpush1.msra.mxu0 0.0
        %1078 = vmatprep.subr.mxu0 0.0
        %1079 = vmatpush1.msra.mxu0 0.0
        %1080 = vmatprep.mubr.f32.mxu0 0.0
        %1081 = vmatmul.mubr.f32.gmra.mrb[0].mxu0 %v313
        %v1082 = vpop.f32.mrb[0].mxu0
        %v1083 = vadd.f32 0.0, %v1082
        %v1084 = vpop.f32.mrb[0].mxu0
        %1085 = vmatprep.mubr.f32.mxu0 0.0
        %1086 = vmatmul.mubr.f32.gmra.mrb[0].mxu0 %v316
        %v1087 = vpop.f32.mrb[0].mxu0
        %v1088 = vadd.f32 0.0, %v1087
        %v1089 = vpop.f32.mrb[0].mxu0
        %1090 = vmatprep.mubr.f32.mxu0 0.0
        %1091 = vmatmul.mubr.f32.gmra.mrb[0].mxu0 %v319
        %v1092 = vpop.f32.mrb[0].mxu0
        %v1093 = vadd.f32 0.0, %v1092
        %v1094 = vpop.f32.mrb[0].mxu0
        %1095 = vmatprep.mubr.f32.mxu0 0.0
        %1096 = vmatmul.mubr.f32.gmra.mrb[0].mxu0 %v322
        %v1097 = vpop.f32.mrb[0].mxu0
        %v1098 = vadd.f32 0.0, %v1097
        %v1099 = vpop.f32.mrb[0].mxu0
        %1100 = vmatprep.mubr.f32.mxu0 0.0
        %1101 = vmatmul.mubr.f32.gmra.mrb[0].mxu0 %v325
        %v1102 = vpop.f32.mrb[0].mxu0
        %v1103 = vadd.f32 0.0, %v1102
        %v1104 = vpop.f32.mrb[0].mxu0
        %1105 = vmatprep.mubr.f32.mxu0 0.0
        %1106 = vmatmul.mubr.f32.gmra.mrb[0].mxu0 %v328
        %v1107 = vpop.f32.mrb[0].mxu0
        %v1108 = vadd.f32 0.0, %v1107
        %v1109 = vpop.f32.mrb[0].mxu0
        %1110 = vmatprep.mubr.f32.mxu0 0.0
        %1111 = vmatmul.mubr.f32.gmra.mrb[0].mxu0 %v331
        %v1112 = vpop.f32.mrb[0].mxu0
        %v1113 = vadd.f32 0.0, %v1112
        %v1114 = vpop.f32.mrb[0].mxu0
        %1115 = vmatprep.mubr.f32.mxu0 0.0
        %1116 = vmatmul.mubr.f32.gmra.mrb[0].mxu0 %v334
        %v1117 = vpop.f32.mrb[0].mxu0
        %v1118 = vadd.f32 0.0, %v1117
        %v1119 = vpop.f32.mrb[0].mxu0
        %1120 = vdwg.mxu0
        %v1121 = vmul.f32 %v1083, %v1083
        %v1122 = vmul.f32 %v1088, %v1088
        %v1123 = vmul.f32 %v1093, %v1093
        %v1124 = vmul.f32 %v1098, %v1098
        %v1125 = vmul.f32 %v1103, %v1103
        %v1126 = vmul.f32 %v1108, %v1108
        %v1127 = vmul.f32 %v1113, %v1113
        %v1128 = vmul.f32 %v1118, %v1118
        %1129 = vmatprep.subr.mxu0 0.0
        %1130 = vmatpush1.msra.mxu0 %v289
        %1131 = vmatprep.subr.mxu0 0.0
        %1132 = vmatpush1.msra.mxu0 %v290
        %1133 = vmatprep.subr.mxu0 0.0
        %1134 = vmatpush1.msra.mxu0 %v291
        %1135 = vmatprep.subr.mxu0 0.0
        %1136 = vmatpush1.msra.mxu0 %v292
        %1137 = vmatprep.subr.mxu0 0.0
        %1138 = vmatpush1.msra.mxu0 %v293
        %1139 = vmatprep.subr.mxu0 0.0
        %1140 = vmatpush1.msra.mxu0 %v294
        %1141 = vmatprep.subr.mxu0 0.0
        %1142 = vmatpush1.msra.mxu0 %v295
        %1143 = vmatprep.subr.mxu0 0.0
        %1144 = vmatpush1.msra.mxu0 %v296
        %1145 = vmatprep.subr.mxu0 0.0
        %1146 = vmatpush1.msra.mxu0 %v297
        %1147 = vmatprep.subr.mxu0 0.0
        %1148 = vmatpush1.msra.mxu0 %v298
        %1149 = vmatprep.subr.mxu0 0.0
        %1150 = vmatpush1.msra.mxu0 %v299
        %1151 = vmatprep.subr.mxu0 0.0
        %1152 = vmatpush1.msra.mxu0 %v300
        %1153 = vmatprep.subr.mxu0 0.0
        %1154 = vmatpush1.msra.mxu0 %v301
        %1155 = vmatprep.subr.mxu0 0.0
        %1156 = vmatpush1.msra.mxu0 %v302
        %1157 = vmatprep.subr.mxu0 0.0
        %1158 = vmatpush1.msra.mxu0 %v303
        %1159 = vmatprep.subr.mxu0 0.0
        %1160 = vmatpush1.msra.mxu0 %v304
        %1161 = vmatprep.subr.mxu0 0.0
        %1162 = vmatpush1.msra.mxu0 0.0
        %1163 = vmatprep.subr.mxu0 0.0
        %1164 = vmatpush1.msra.mxu0 0.0
        %1165 = vmatprep.subr.mxu0 0.0
        %1166 = vmatpush1.msra.mxu0 0.0
        %1167 = vmatprep.subr.mxu0 0.0
        %1168 = vmatpush1.msra.mxu0 0.0
        %1169 = vmatprep.subr.mxu0 0.0
        %1170 = vmatpush1.msra.mxu0 0.0
        %1171 = vmatprep.subr.mxu0 0.0
        %1172 = vmatpush1.msra.mxu0 0.0
        %1173 = vmatprep.subr.mxu0 0.0
        %1174 = vmatpush1.msra.mxu0 0.0
        %1175 = vmatprep.subr.mxu0 0.0
        %1176 = vmatpush1.msra.mxu0 0.0
        %1177 = vmatprep.subr.mxu0 0.0
        %1178 = vmatpush1.msra.mxu0 0.0
        %1179 = vmatprep.subr.mxu0 0.0
        %1180 = vmatpush1.msra.mxu0 0.0
        %1181 = vmatprep.subr.mxu0 0.0
        %1182 = vmatpush1.msra.mxu0 0.0
        %1183 = vmatprep.subr.mxu0 0.0
        %1184 = vmatpush1.msra.mxu0 0.0
        %1185 = vmatprep.subr.mxu0 0.0
        %1186 = vmatpush1.msra.mxu0 0.0
        %1187 = vmatprep.subr.mxu0 0.0
        %1188 = vmatpush1.msra.mxu0 0.0
        %1189 = vmatprep.subr.mxu0 0.0
        %1190 = vmatpush1.msra.mxu0 0.0
        %1191 = vmatprep.subr.mxu0 0.0
        %1192 = vmatpush1.msra.mxu0 0.0
        %1193 = vmatprep.mubr.f32.mxu0 0.0
        %1194 = vmatmul.mubr.f32.gmra.mrb[0].mxu0 %v1121
        %v1195 = vpop.f32.mrb[0].mxu0
        %v1196 = vadd.f32 0.0, %v1195
        %v1197 = vpop.f32.mrb[0].mxu0
        %1198 = vmatprep.mubr.f32.mxu0 0.0
        %1199 = vmatmul.mubr.f32.gmra.mrb[0].mxu0 %v1122
        %v1200 = vpop.f32.mrb[0].mxu0
        %v1201 = vadd.f32 0.0, %v1200
        %v1202 = vpop.f32.mrb[0].mxu0
        %1203 = vmatprep.mubr.f32.mxu0 0.0
        %1204 = vmatmul.mubr.f32.gmra.mrb[0].mxu0 %v1123
        %v1205 = vpop.f32.mrb[0].mxu0
        %v1206 = vadd.f32 0.0, %v1205
        %v1207 = vpop.f32.mrb[0].mxu0
        %1208 = vmatprep.mubr.f32.mxu0 0.0
        %1209 = vmatmul.mubr.f32.gmra.mrb[0].mxu0 %v1124
        %v1210 = vpop.f32.mrb[0].mxu0
        %v1211 = vadd.f32 0.0, %v1210
        %v1212 = vpop.f32.mrb[0].mxu0
        %1213 = vmatprep.mubr.f32.mxu0 0.0
        %1214 = vmatmul.mubr.f32.gmra.mrb[0].mxu0 %v1125
        %v1215 = vpop.f32.mrb[0].mxu0
        %v1216 = vadd.f32 0.0, %v1215
        %v1217 = vpop.f32.mrb[0].mxu0
        %1218 = vmatprep.mubr.f32.mxu0 0.0
        %1219 = vmatmul.mubr.f32.gmra.mrb[0].mxu0 %v1126
        %v1220 = vpop.f32.mrb[0].mxu0
        %v1221 = vadd.f32 0.0, %v1220
        %v1222 = vpop.f32.mrb[0].mxu0
        %1223 = vmatprep.mubr.f32.mxu0 0.0
        %1224 = vmatmul.mubr.f32.gmra.mrb[0].mxu0 %v1127
        %v1225 = vpop.f32.mrb[0].mxu0
        %v1226 = vadd.f32 0.0, %v1225
        %v1227 = vpop.f32.mrb[0].mxu0
        %1228 = vmatprep.mubr.f32.mxu0 0.0
        %1229 = vmatmul.mubr.f32.gmra.mrb[0].mxu0 %v1128
        %v1230 = vpop.f32.mrb[0].mxu0
        %v1231 = vadd.f32 0.0, %v1230
        %v1232 = vpop.f32.mrb[0].mxu0
        %1233 = vdwg.mxu0
        %v1234 = vmul.f32 %v1196, 0.03125
        %v1235 = vmul.f32 %v1201, 0.03125
        %v1236 = vmul.f32 %v1206, 0.03125
        %v1237 = vmul.f32 %v1211, 0.03125
        %v1238 = vmul.f32 %v1216, 0.03125
        %v1239 = vmul.f32 %v1221, 0.03125
        %v1240 = vmul.f32 %v1226, 0.03125
        %v1241 = vmul.f32 %v1231, 0.03125
        %1250 = vrot.lane.b32.xlu0 %v671, 124
        %v1251 = vpop.permute.xlu0 %1250
        %1252 = vrot.lane.b32.xlu0 %v672, 124
        %v1253 = vpop.permute.xlu0 %1252
        %1254 = vrot.lane.b32.xlu0 %v673, 124
        %v1255 = vpop.permute.xlu0 %1254
        %1256 = vrot.lane.b32.xlu0 %v674, 124
        %v1257 = vpop.permute.xlu0 %1256
        %1258 = vrot.lane.b32.xlu0 %v675, 124
        %v1259 = vpop.permute.xlu0 %1258
        %1260 = vrot.lane.b32.xlu0 %v676, 124
        %v1261 = vpop.permute.xlu0 %1260
        %1262 = vrot.lane.b32.xlu0 %v677, 124
        %v1263 = vpop.permute.xlu0 %1262
        %1264 = vrot.lane.b32.xlu0 %v678, 124
        %v1265 = vpop.permute.xlu0 %1264
        %v1274 = vsub.f32 %v1234, %v1251
        %v1275 = vsub.f32 %v1235, %v1253
        %v1276 = vsub.f32 %v1236, %v1255
        %v1277 = vsub.f32 %v1237, %v1257
        %v1278 = vsub.f32 %v1238, %v1259
        %v1279 = vsub.f32 %v1239, %v1261
        %v1280 = vsub.f32 %v1240, %v1263
        %v1281 = vsub.f32 %v1241, %v1265
        %v1282 = vadd.f32 %v1274, 1e-05
        %v1283 = vadd.f32 %v1275, 1e-05
        %v1284 = vadd.f32 %v1276, 1e-05
        %v1285 = vadd.f32 %v1277, 1e-05
        %v1286 = vadd.f32 %v1278, 1e-05
        %v1287 = vadd.f32 %v1279, 1e-05
        %v1288 = vadd.f32 %v1280, 1e-05
        %v1289 = vadd.f32 %v1281, 1e-05
        %v1290 = vrsqrt.pop %v1282
        %v1291 = vrsqrt.pop %v1283
        %v1292 = vrsqrt.pop %v1284
        %v1293 = vrsqrt.pop %v1285
        %v1294 = vrsqrt.pop %v1286
        %v1295 = vrsqrt.pop %v1287
        %v1296 = vrsqrt.pop %v1288
        %v1297 = vrsqrt.pop %v1289
        %v1299 = vsel %vm703, %v1290, 0
        %v1302 = vsel %vm703, %v1291, 0
        %v1305 = vsel %vm703, %v1292, 0
        %v1308 = vsel %vm703, %v1293, 0
        %v1311 = vsel %vm703, %v1294, 0
        %v1314 = vsel %vm703, %v1295, 0
        %v1317 = vsel %vm703, %v1296, 0
        %v1320 = vsel %vm703, %v1297, 0
        %1322 = vmatprep.subr.mxu0 0.0
        %1323 = vmatpush1.msra.mxu0 %v730
        %1324 = vmatprep.subr.mxu0 0.0
        %1325 = vmatpush1.msra.mxu0 0.0
        %1326 = vmatprep.subr.mxu0 0.0
        %1327 = vmatpush1.msra.mxu0 0.0
        %1328 = vmatprep.subr.mxu0 0.0
        %1329 = vmatpush1.msra.mxu0 0.0
        %1330 = vmatprep.subr.mxu0 0.0
        %1331 = vmatpush1.msra.mxu0 0.0
        %1332 = vmatprep.subr.mxu0 0.0
        %1333 = vmatpush1.msra.mxu0 0.0
        %1334 = vmatprep.subr.mxu0 0.0
        %1335 = vmatpush1.msra.mxu0 0.0
        %1336 = vmatprep.subr.mxu0 0.0
        %1337 = vmatpush1.msra.mxu0 0.0
        %1338 = vmatprep.subr.mxu0 0.0
        %1339 = vmatpush1.msra.mxu0 0.0
        %1340 = vmatprep.subr.mxu0 0.0
        %1341 = vmatpush1.msra.mxu0 0.0
        %1342 = vmatprep.subr.mxu0 0.0
        %1343 = vmatpush1.msra.mxu0 0.0
        %1344 = vmatprep.subr.mxu0 0.0
        %1345 = vmatpush1.msra.mxu0 0.0
        %1346 = vmatprep.subr.mxu0 0.0
        %1347 = vmatpush1.msra.mxu0 0.0
        %1348 = vmatprep.subr.mxu0 0.0
        %1349 = vmatpush1.msra.mxu0 0.0
        %1350 = vmatprep.subr.mxu0 0.0
        %1351 = vmatpush1.msra.mxu0 0.0
        %1352 = vmatprep.subr.mxu0 0.0
        %1353 = vmatpush1.msra.mxu0 0.0
        %1354 = vmatprep.subr.mxu0 0.0
        %1355 = vmatpush1.msra.mxu0 0.0
        %1356 = vmatprep.subr.mxu0 0.0
        %1357 = vmatpush1.msra.mxu0 0.0
        %1358 = vmatprep.subr.mxu0 0.0
        %1359 = vmatpush1.msra.mxu0 0.0
        %1360 = vmatprep.subr.mxu0 0.0
        %1361 = vmatpush1.msra.mxu0 0.0
        %1362 = vmatprep.subr.mxu0 0.0
        %1363 = vmatpush1.msra.mxu0 0.0
        %1364 = vmatprep.subr.mxu0 0.0
        %1365 = vmatpush1.msra.mxu0 0.0
        %1366 = vmatprep.subr.mxu0 0.0
        %1367 = vmatpush1.msra.mxu0 0.0
        %1368 = vmatprep.subr.mxu0 0.0
        %1369 = vmatpush1.msra.mxu0 0.0
        %1370 = vmatprep.subr.mxu0 0.0
        %1371 = vmatpush1.msra.mxu0 0.0
        %1372 = vmatprep.subr.mxu0 0.0
        %1373 = vmatpush1.msra.mxu0 0.0
        %1374 = vmatprep.subr.mxu0 0.0
        %1375 = vmatpush1.msra.mxu0 0.0
        %1376 = vmatprep.subr.mxu0 0.0
        %1377 = vmatpush1.msra.mxu0 0.0
        %1378 = vmatprep.subr.mxu0 0.0
        %1379 = vmatpush1.msra.mxu0 0.0
        %1380 = vmatprep.subr.mxu0 0.0
        %1381 = vmatpush1.msra.mxu0 0.0
        %1382 = vmatprep.subr.mxu0 0.0
        %1383 = vmatpush1.msra.mxu0 0.0
        %1384 = vmatprep.subr.mxu0 0.0
        %1385 = vmatpush1.msra.mxu0 0.0
        %1386 = vmatprep.mubr.f32.mxu0 0.0
        %1387 = vmatmul.mubr.f32.gmra.mrb[0].mxu0 %v1299
        %v1388 = vpop.f32.mrb[0].mxu0
        %v1389 = vadd.f32 0.0, %v1388
        %v1390 = vpop.f32.mrb[0].mxu0
        %1391 = vmatprep.mubr.f32.mxu0 0.0
        %1392 = vmatmul.mubr.f32.gmra.mrb[0].mxu0 %v1302
        %v1393 = vpop.f32.mrb[0].mxu0
        %v1394 = vadd.f32 0.0, %v1393
        %v1395 = vpop.f32.mrb[0].mxu0
        %1396 = vmatprep.mubr.f32.mxu0 0.0
        %1397 = vmatmul.mubr.f32.gmra.mrb[0].mxu0 %v1305
        %v1398 = vpop.f32.mrb[0].mxu0
        %v1399 = vadd.f32 0.0, %v1398
        %v1400 = vpop.f32.mrb[0].mxu0
        %1401 = vmatprep.mubr.f32.mxu0 0.0
        %1402 = vmatmul.mubr.f32.gmra.mrb[0].mxu0 %v1308
        %v1403 = vpop.f32.mrb[0].mxu0
        %v1404 = vadd.f32 0.0, %v1403
        %v1405 = vpop.f32.mrb[0].mxu0
        %1406 = vmatprep.mubr.f32.mxu0 0.0
        %1407 = vmatmul.mubr.f32.gmra.mrb[0].mxu0 %v1311
        %v1408 = vpop.f32.mrb[0].mxu0
        %v1409 = vadd.f32 0.0, %v1408
        %v1410 = vpop.f32.mrb[0].mxu0
        %1411 = vmatprep.mubr.f32.mxu0 0.0
        %1412 = vmatmul.mubr.f32.gmra.mrb[0].mxu0 %v1314
        %v1413 = vpop.f32.mrb[0].mxu0
        %v1414 = vadd.f32 0.0, %v1413
        %v1415 = vpop.f32.mrb[0].mxu0
        %1416 = vmatprep.mubr.f32.mxu0 0.0
        %1417 = vmatmul.mubr.f32.gmra.mrb[0].mxu0 %v1317
        %v1418 = vpop.f32.mrb[0].mxu0
        %v1419 = vadd.f32 0.0, %v1418
        %v1420 = vpop.f32.mrb[0].mxu0
        %1421 = vmatprep.mubr.f32.mxu0 0.0
        %1422 = vmatmul.mubr.f32.gmra.mrb[0].mxu0 %v1320
        %v1423 = vpop.f32.mrb[0].mxu0
        %v1424 = vadd.f32 0.0, %v1423
        %v1425 = vpop.f32.mrb[0].mxu0
        %1426 = vdwg.mxu0
        %1427 = vrot.lane.b32.xlu0 %v1290, 4
        %v1428 = vpop.permute.xlu0 %1427
        %1429 = vrot.lane.b32.xlu0 %v1291, 4
        %v1430 = vpop.permute.xlu0 %1429
        %1431 = vrot.lane.b32.xlu0 %v1292, 4
        %v1432 = vpop.permute.xlu0 %1431
        %1433 = vrot.lane.b32.xlu0 %v1293, 4
        %v1434 = vpop.permute.xlu0 %1433
        %1435 = vrot.lane.b32.xlu0 %v1294, 4
        %v1436 = vpop.permute.xlu0 %1435
        %1437 = vrot.lane.b32.xlu0 %v1295, 4
        %v1438 = vpop.permute.xlu0 %1437
        %1439 = vrot.lane.b32.xlu0 %v1296, 4
        %v1440 = vpop.permute.xlu0 %1439
        %1441 = vrot.lane.b32.xlu0 %v1297, 4
        %v1442 = vpop.permute.xlu0 %1441
        %v1451 = vmul.f32 %v403, %v1428
        %v1452 = vmul.f32 %v408, %v1430
        %v1453 = vmul.f32 %v413, %v1432
        %v1454 = vmul.f32 %v418, %v1434
        %v1455 = vmul.f32 %v423, %v1436
        %v1456 = vmul.f32 %v428, %v1438
        %v1457 = vmul.f32 %v433, %v1440
        %v1458 = vmul.f32 %v438, %v1442
        %1467 = vrot.lane.b32.xlu0 %v1451, 124
        %v1468 = vpop.permute.xlu0 %1467
        %1469 = vrot.lane.b32.xlu0 %v1452, 124
        %v1470 = vpop.permute.xlu0 %1469
        %1471 = vrot.lane.b32.xlu0 %v1453, 124
        %v1472 = vpop.permute.xlu0 %1471
        %1473 = vrot.lane.b32.xlu0 %v1454, 124
        %v1474 = vpop.permute.xlu0 %1473
        %1475 = vrot.lane.b32.xlu0 %v1455, 124
        %v1476 = vpop.permute.xlu0 %1475
        %1477 = vrot.lane.b32.xlu0 %v1456, 124
        %v1478 = vpop.permute.xlu0 %1477
        %1479 = vrot.lane.b32.xlu0 %v1457, 124
        %v1480 = vpop.permute.xlu0 %1479
        %1481 = vrot.lane.b32.xlu0 %v1458, 124
        %v1482 = vpop.permute.xlu0 %1481
        %v1483 = vsel %vm703, %v1468, 0
        %v1485 = vsel %vm703, %v1470, 0
        %v1487 = vsel %vm703, %v1472, 0
        %v1489 = vsel %vm703, %v1474, 0
        %v1491 = vsel %vm703, %v1476, 0
        %v1493 = vsel %vm703, %v1478, 0
        %v1495 = vsel %vm703, %v1480, 0
        %v1497 = vsel %vm703, %v1482, 0
        %1499 = vmatprep.subr.mxu0 0.0
        %1500 = vmatpush1.msra.mxu0 %v730
        %1501 = vmatprep.subr.mxu0 0.0
        %1502 = vmatpush1.msra.mxu0 0.0
        %1503 = vmatprep.subr.mxu0 0.0
        %1504 = vmatpush1.msra.mxu0 0.0
        %1505 = vmatprep.subr.mxu0 0.0
        %1506 = vmatpush1.msra.mxu0 0.0
        %1507 = vmatprep.subr.mxu0 0.0
        %1508 = vmatpush1.msra.mxu0 0.0
        %1509 = vmatprep.subr.mxu0 0.0
        %1510 = vmatpush1.msra.mxu0 0.0
        %1511 = vmatprep.subr.mxu0 0.0
        %1512 = vmatpush1.msra.mxu0 0.0
        %1513 = vmatprep.subr.mxu0 0.0
        %1514 = vmatpush1.msra.mxu0 0.0
        %1515 = vmatprep.subr.mxu0 0.0
        %1516 = vmatpush1.msra.mxu0 0.0
        %1517 = vmatprep.subr.mxu0 0.0
        %1518 = vmatpush1.msra.mxu0 0.0
        %1519 = vmatprep.subr.mxu0 0.0
        %1520 = vmatpush1.msra.mxu0 0.0
        %1521 = vmatprep.subr.mxu0 0.0
        %1522 = vmatpush1.msra.mxu0 0.0
        %1523 = vmatprep.subr.mxu0 0.0
        %1524 = vmatpush1.msra.mxu0 0.0
        %1525 = vmatprep.subr.mxu0 0.0
        %1526 = vmatpush1.msra.mxu0 0.0
        %1527 = vmatprep.subr.mxu0 0.0
        %1528 = vmatpush1.msra.mxu0 0.0
        %1529 = vmatprep.subr.mxu0 0.0
        %1530 = vmatpush1.msra.mxu0 0.0
        %1531 = vmatprep.subr.mxu0 0.0
        %1532 = vmatpush1.msra.mxu0 0.0
        %1533 = vmatprep.subr.mxu0 0.0
        %1534 = vmatpush1.msra.mxu0 0.0
        %1535 = vmatprep.subr.mxu0 0.0
        %1536 = vmatpush1.msra.mxu0 0.0
        %1537 = vmatprep.subr.mxu0 0.0
        %1538 = vmatpush1.msra.mxu0 0.0
        %1539 = vmatprep.subr.mxu0 0.0
        %1540 = vmatpush1.msra.mxu0 0.0
        %1541 = vmatprep.subr.mxu0 0.0
        %1542 = vmatpush1.msra.mxu0 0.0
        %1543 = vmatprep.subr.mxu0 0.0
        %1544 = vmatpush1.msra.mxu0 0.0
        %1545 = vmatprep.subr.mxu0 0.0
        %1546 = vmatpush1.msra.mxu0 0.0
        %1547 = vmatprep.subr.mxu0 0.0
        %1548 = vmatpush1.msra.mxu0 0.0
        %1549 = vmatprep.subr.mxu0 0.0
        %1550 = vmatpush1.msra.mxu0 0.0
        %1551 = vmatprep.subr.mxu0 0.0
        %1552 = vmatpush1.msra.mxu0 0.0
        %1553 = vmatprep.subr.mxu0 0.0
        %1554 = vmatpush1.msra.mxu0 0.0
        %1555 = vmatprep.subr.mxu0 0.0
        %1556 = vmatpush1.msra.mxu0 0.0
        %1557 = vmatprep.subr.mxu0 0.0
        %1558 = vmatpush1.msra.mxu0 0.0
        %1559 = vmatprep.subr.mxu0 0.0
        %1560 = vmatpush1.msra.mxu0 0.0
        %1561 = vmatprep.subr.mxu0 0.0
        %1562 = vmatpush1.msra.mxu0 0.0
        %1563 = vmatprep.mubr.f32.mxu0 0.0
        %1564 = vmatmul.mubr.f32.gmra.mrb[0].mxu0 %v1483
        %v1565 = vpop.f32.mrb[0].mxu0
        %v1566 = vadd.f32 0.0, %v1565
        %v1567 = vpop.f32.mrb[0].mxu0
        %1568 = vmatprep.mubr.f32.mxu0 0.0
        %1569 = vmatmul.mubr.f32.gmra.mrb[0].mxu0 %v1485
        %v1570 = vpop.f32.mrb[0].mxu0
        %v1571 = vadd.f32 0.0, %v1570
        %v1572 = vpop.f32.mrb[0].mxu0
        %1573 = vmatprep.mubr.f32.mxu0 0.0
        %1574 = vmatmul.mubr.f32.gmra.mrb[0].mxu0 %v1487
        %v1575 = vpop.f32.mrb[0].mxu0
        %v1576 = vadd.f32 0.0, %v1575
        %v1577 = vpop.f32.mrb[0].mxu0
        %1578 = vmatprep.mubr.f32.mxu0 0.0
        %1579 = vmatmul.mubr.f32.gmra.mrb[0].mxu0 %v1489
        %v1580 = vpop.f32.mrb[0].mxu0
        %v1581 = vadd.f32 0.0, %v1580
        %v1582 = vpop.f32.mrb[0].mxu0
        %1583 = vmatprep.mubr.f32.mxu0 0.0
        %1584 = vmatmul.mubr.f32.gmra.mrb[0].mxu0 %v1491
        %v1585 = vpop.f32.mrb[0].mxu0
        %v1586 = vadd.f32 0.0, %v1585
        %v1587 = vpop.f32.mrb[0].mxu0
        %1588 = vmatprep.mubr.f32.mxu0 0.0
        %1589 = vmatmul.mubr.f32.gmra.mrb[0].mxu0 %v1493
        %v1590 = vpop.f32.mrb[0].mxu0
        %v1591 = vadd.f32 0.0, %v1590
        %v1592 = vpop.f32.mrb[0].mxu0
        %1593 = vmatprep.mubr.f32.mxu0 0.0
        %1594 = vmatmul.mubr.f32.gmra.mrb[0].mxu0 %v1495
        %v1595 = vpop.f32.mrb[0].mxu0
        %v1596 = vadd.f32 0.0, %v1595
        %v1597 = vpop.f32.mrb[0].mxu0
        %1598 = vmatprep.mubr.f32.mxu0 0.0
        %1599 = vmatmul.mubr.f32.gmra.mrb[0].mxu0 %v1497
        %v1600 = vpop.f32.mrb[0].mxu0
        %v1601 = vadd.f32 0.0, %v1600
        %v1602 = vpop.f32.mrb[0].mxu0
        %1603 = vdwg.mxu0
        %v1604 = vsub.f32 %v978, %v1566
        %v1605 = vsub.f32 %v978, %v1571
        %v1606 = vsub.f32 %v978, %v1576
        %v1607 = vsub.f32 %v978, %v1581
        %v1608 = vsub.f32 %v978, %v1586
        %v1609 = vsub.f32 %v978, %v1591
        %v1610 = vsub.f32 %v978, %v1596
        %v1611 = vsub.f32 %v978, %v1601
        %v1612 = vmul.f32 %v1083, %v1389
        %v1613 = vmul.f32 %v1088, %v1394
        %v1614 = vmul.f32 %v1093, %v1399
        %v1615 = vmul.f32 %v1098, %v1404
        %v1616 = vmul.f32 %v1103, %v1409
        %v1617 = vmul.f32 %v1108, %v1414
        %v1618 = vmul.f32 %v1113, %v1419
        %v1619 = vmul.f32 %v1118, %v1424
        %v1620 = vadd.f32 %v1612, %v1604
        %v1621 = vadd.f32 %v1613, %v1605
        %v1622 = vadd.f32 %v1614, %v1606
        %v1623 = vadd.f32 %v1615, %v1607
        %v1624 = vadd.f32 %v1616, %v1608
        %v1625 = vadd.f32 %v1617, %v1609
        %v1626 = vadd.f32 %v1618, %v1610
        %v1627 = vadd.f32 %v1619, %v1611
        %s1628 = scalar_lea.vmem %s269, 8 [#allocation2]
        %1629 = vst [vmem:[%s1628] sm:$0xff] %v1620
        %1630 = vst [vmem:[%s1628 + $0x20] sm:$0xff] %v1621
        %1631 = vst [vmem:[%s1628 + $0x40] sm:$0xff] %v1622
        %1632 = vst [vmem:[%s1628 + $0x60] sm:$0xff] %v1623
        %1633 = vst [vmem:[%s1628 + $0x80] sm:$0xff] %v1624
        %1634 = vst [vmem:[%s1628 + $0xa0] sm:$0xff] %v1625
        %1635 = vst [vmem:[%s1628 + $0xc0] sm:$0xff] %v1626
        %1636 = vst [vmem:[%s1628 + $0xe0] sm:$0xff] %v1627
        %v1637 = vld [vmem:[%s1 + $0x10] sm:$0xff]
        %v1638 = vld [vmem:[%s1 + $0x30] sm:$0xff]
        %v1639 = vld [vmem:[%s1 + $0x50] sm:$0xff]
        %v1640 = vld [vmem:[%s1 + $0x70] sm:$0xff]
        %1641 = vmatprep.subr.mxu0 0.0
        %1642 = vmatpush1.msra.mxu0 %v1637
        %1643 = vmatprep.subr.mxu0 0.0
        %1644 = vmatpush1.msra.mxu0 %v1638
        %1645 = vmatprep.subr.mxu0 0.0
        %1646 = vmatpush1.msra.mxu0 %v1639
        %1647 = vmatprep.subr.mxu0 0.0
        %1648 = vmatpush1.msra.mxu0 %v1640
        %1649 = vmatprep.subr.mxu0 0.0
        %1650 = vmatpush1.msra.mxu0 0.0
        %1651 = vmatprep.subr.mxu0 0.0
        %1652 = vmatpush1.msra.mxu0 0.0
        %1653 = vmatprep.subr.mxu0 0.0
        %1654 = vmatpush1.msra.mxu0 0.0
        %1655 = vmatprep.subr.mxu0 0.0
        %1656 = vmatpush1.msra.mxu0 0.0
        %1657 = vmatprep.subr.mxu0 0.0
        %1658 = vmatpush1.msra.mxu0 0.0
        %1659 = vmatprep.subr.mxu0 0.0
        %1660 = vmatpush1.msra.mxu0 0.0
        %1661 = vmatprep.subr.mxu0 0.0
        %1662 = vmatpush1.msra.mxu0 0.0
        %1663 = vmatprep.subr.mxu0 0.0
        %1664 = vmatpush1.msra.mxu0 0.0
        %1665 = vmatprep.subr.mxu0 0.0
        %1666 = vmatpush1.msra.mxu0 0.0
        %1667 = vmatprep.subr.mxu0 0.0
        %1668 = vmatpush1.msra.mxu0 0.0
        %1669 = vmatprep.subr.mxu0 0.0
        %1670 = vmatpush1.msra.mxu0 0.0
        %1671 = vmatprep.subr.mxu0 0.0
        %1672 = vmatpush1.msra.mxu0 0.0
        %1673 = vmatprep.subr.mxu0 0.0
        %1674 = vmatpush1.msra.mxu0 0.0
        %1675 = vmatprep.subr.mxu0 0.0
        %1676 = vmatpush1.msra.mxu0 0.0
        %1677 = vmatprep.subr.mxu0 0.0
        %1678 = vmatpush1.msra.mxu0 0.0
        %1679 = vmatprep.subr.mxu0 0.0
        %1680 = vmatpush1.msra.mxu0 0.0
        %1681 = vmatprep.subr.mxu0 0.0
        %1682 = vmatpush1.msra.mxu0 0.0
        %1683 = vmatprep.subr.mxu0 0.0
        %1684 = vmatpush1.msra.mxu0 0.0
        %1685 = vmatprep.subr.mxu0 0.0
        %1686 = vmatpush1.msra.mxu0 0.0
        %1687 = vmatprep.subr.mxu0 0.0
        %1688 = vmatpush1.msra.mxu0 0.0
        %1689 = vmatprep.subr.mxu0 0.0
        %1690 = vmatpush1.msra.mxu0 0.0
        %1691 = vmatprep.subr.mxu0 0.0
        %1692 = vmatpush1.msra.mxu0 0.0
        %1693 = vmatprep.subr.mxu0 0.0
        %1694 = vmatpush1.msra.mxu0 0.0
        %1695 = vmatprep.subr.mxu0 0.0
        %1696 = vmatpush1.msra.mxu0 0.0
        %1697 = vmatprep.subr.mxu0 0.0
        %1698 = vmatpush1.msra.mxu0 0.0
        %1699 = vmatprep.subr.mxu0 0.0
        %1700 = vmatpush1.msra.mxu0 0.0
        %1701 = vmatprep.subr.mxu0 0.0
        %1702 = vmatpush1.msra.mxu0 0.0
        %1703 = vmatprep.subr.mxu0 0.0
        %1704 = vmatpush1.msra.mxu0 0.0
        %1705 = vmatprep.mubr.f32.mxu0 0.0
        %1706 = vmatmul.mubr.f32.gmra.mrb[0].mxu0 %v313
        %v1707 = vpop.f32.mrb[0].mxu0
        %v1708 = vadd.f32 0.0, %v1707
        %v1709 = vpop.f32.mrb[0].mxu0
        %1710 = vmatprep.mubr.f32.mxu0 0.0
        %1711 = vmatmul.mubr.f32.gmra.mrb[0].mxu0 %v316
        %v1712 = vpop.f32.mrb[0].mxu0
        %v1713 = vadd.f32 0.0, %v1712
        %v1714 = vpop.f32.mrb[0].mxu0
        %1715 = vmatprep.mubr.f32.mxu0 0.0
        %1716 = vmatmul.mubr.f32.gmra.mrb[0].mxu0 %v319
        %v1717 = vpop.f32.mrb[0].mxu0
        %v1718 = vadd.f32 0.0, %v1717
        %v1719 = vpop.f32.mrb[0].mxu0
        %1720 = vmatprep.mubr.f32.mxu0 0.0
        %1721 = vmatmul.mubr.f32.gmra.mrb[0].mxu0 %v322
        %v1722 = vpop.f32.mrb[0].mxu0
        %v1723 = vadd.f32 0.0, %v1722
        %v1724 = vpop.f32.mrb[0].mxu0
        %1725 = vmatprep.mubr.f32.mxu0 0.0
        %1726 = vmatmul.mubr.f32.gmra.mrb[0].mxu0 %v325
        %v1727 = vpop.f32.mrb[0].mxu0
        %v1728 = vadd.f32 0.0, %v1727
        %v1729 = vpop.f32.mrb[0].mxu0
        %1730 = vmatprep.mubr.f32.mxu0 0.0
        %1731 = vmatmul.mubr.f32.gmra.mrb[0].mxu0 %v328
        %v1732 = vpop.f32.mrb[0].mxu0
        %v1733 = vadd.f32 0.0, %v1732
        %v1734 = vpop.f32.mrb[0].mxu0
        %1735 = vmatprep.mubr.f32.mxu0 0.0
        %1736 = vmatmul.mubr.f32.gmra.mrb[0].mxu0 %v331
        %v1737 = vpop.f32.mrb[0].mxu0
        %v1738 = vadd.f32 0.0, %v1737
        %v1739 = vpop.f32.mrb[0].mxu0
        %1740 = vmatprep.mubr.f32.mxu0 0.0
        %1741 = vmatmul.mubr.f32.gmra.mrb[0].mxu0 %v334
        %v1742 = vpop.f32.mrb[0].mxu0
        %v1743 = vadd.f32 0.0, %v1742
        %v1744 = vpop.f32.mrb[0].mxu0
        %1745 = vdwg.mxu0
        %v1746 = vmul.f32 %v1708, %v1708
        %v1747 = vmul.f32 %v1713, %v1713
        %v1748 = vmul.f32 %v1718, %v1718
        %v1749 = vmul.f32 %v1723, %v1723
        %v1750 = vmul.f32 %v1728, %v1728
        %v1751 = vmul.f32 %v1733, %v1733
        %v1752 = vmul.f32 %v1738, %v1738
        %v1753 = vmul.f32 %v1743, %v1743
        %1754 = vmatprep.subr.mxu0 0.0
        %1755 = vmatpush1.msra.mxu0 %v289
        %1756 = vmatprep.subr.mxu0 0.0
        %1757 = vmatpush1.msra.mxu0 %v290
        %1758 = vmatprep.subr.mxu0 0.0
        %1759 = vmatpush1.msra.mxu0 %v291
        %1760 = vmatprep.subr.mxu0 0.0
        %1761 = vmatpush1.msra.mxu0 %v292
        %1762 = vmatprep.subr.mxu0 0.0
        %1763 = vmatpush1.msra.mxu0 %v293
        %1764 = vmatprep.subr.mxu0 0.0
        %1765 = vmatpush1.msra.mxu0 %v294
        %1766 = vmatprep.subr.mxu0 0.0
        %1767 = vmatpush1.msra.mxu0 %v295
        %1768 = vmatprep.subr.mxu0 0.0
        %1769 = vmatpush1.msra.mxu0 %v296
        %1770 = vmatprep.subr.mxu0 0.0
        %1771 = vmatpush1.msra.mxu0 %v297
        %1772 = vmatprep.subr.mxu0 0.0
        %1773 = vmatpush1.msra.mxu0 %v298
        %1774 = vmatprep.subr.mxu0 0.0
        %1775 = vmatpush1.msra.mxu0 %v299
        %1776 = vmatprep.subr.mxu0 0.0
        %1777 = vmatpush1.msra.mxu0 %v300
        %1778 = vmatprep.subr.mxu0 0.0
        %1779 = vmatpush1.msra.mxu0 %v301
        %1780 = vmatprep.subr.mxu0 0.0
        %1781 = vmatpush1.msra.mxu0 %v302
        %1782 = vmatprep.subr.mxu0 0.0
        %1783 = vmatpush1.msra.mxu0 %v303
        %1784 = vmatprep.subr.mxu0 0.0
        %1785 = vmatpush1.msra.mxu0 %v304
        %1786 = vmatprep.subr.mxu0 0.0
        %1787 = vmatpush1.msra.mxu0 0.0
        %1788 = vmatprep.subr.mxu0 0.0
        %1789 = vmatpush1.msra.mxu0 0.0
        %1790 = vmatprep.subr.mxu0 0.0
        %1791 = vmatpush1.msra.mxu0 0.0
        %1792 = vmatprep.subr.mxu0 0.0
        %1793 = vmatpush1.msra.mxu0 0.0
        %1794 = vmatprep.subr.mxu0 0.0
        %1795 = vmatpush1.msra.mxu0 0.0
        %1796 = vmatprep.subr.mxu0 0.0
        %1797 = vmatpush1.msra.mxu0 0.0
        %1798 = vmatprep.subr.mxu0 0.0
        %1799 = vmatpush1.msra.mxu0 0.0
        %1800 = vmatprep.subr.mxu0 0.0
        %1801 = vmatpush1.msra.mxu0 0.0
        %1802 = vmatprep.subr.mxu0 0.0
        %1803 = vmatpush1.msra.mxu0 0.0
        %1804 = vmatprep.subr.mxu0 0.0
        %1805 = vmatpush1.msra.mxu0 0.0
        %1806 = vmatprep.subr.mxu0 0.0
        %1807 = vmatpush1.msra.mxu0 0.0
        %1808 = vmatprep.subr.mxu0 0.0
        %1809 = vmatpush1.msra.mxu0 0.0
        %1810 = vmatprep.subr.mxu0 0.0
        %1811 = vmatpush1.msra.mxu0 0.0
        %1812 = vmatprep.subr.mxu0 0.0
        %1813 = vmatpush1.msra.mxu0 0.0
        %1814 = vmatprep.subr.mxu0 0.0
        %1815 = vmatpush1.msra.mxu0 0.0
        %1816 = vmatprep.subr.mxu0 0.0
        %1817 = vmatpush1.msra.mxu0 0.0
        %1818 = vmatprep.mubr.f32.mxu0 0.0
        %1819 = vmatmul.mubr.f32.gmra.mrb[0].mxu0 %v1746
        %v1820 = vpop.f32.mrb[0].mxu0
        %v1821 = vadd.f32 0.0, %v1820
        %v1822 = vpop.f32.mrb[0].mxu0
        %1823 = vmatprep.mubr.f32.mxu0 0.0
        %1824 = vmatmul.mubr.f32.gmra.mrb[0].mxu0 %v1747
        %v1825 = vpop.f32.mrb[0].mxu0
        %v1826 = vadd.f32 0.0, %v1825
        %v1827 = vpop.f32.mrb[0].mxu0
        %1828 = vmatprep.mubr.f32.mxu0 0.0
        %1829 = vmatmul.mubr.f32.gmra.mrb[0].mxu0 %v1748
        %v1830 = vpop.f32.mrb[0].mxu0
        %v1831 = vadd.f32 0.0, %v1830
        %v1832 = vpop.f32.mrb[0].mxu0
        %1833 = vmatprep.mubr.f32.mxu0 0.0
        %1834 = vmatmul.mubr.f32.gmra.mrb[0].mxu0 %v1749
        %v1835 = vpop.f32.mrb[0].mxu0
        %v1836 = vadd.f32 0.0, %v1835
        %v1837 = vpop.f32.mrb[0].mxu0
        %1838 = vmatprep.mubr.f32.mxu0 0.0
        %1839 = vmatmul.mubr.f32.gmra.mrb[0].mxu0 %v1750
        %v1840 = vpop.f32.mrb[0].mxu0
        %v1841 = vadd.f32 0.0, %v1840
        %v1842 = vpop.f32.mrb[0].mxu0
        %1843 = vmatprep.mubr.f32.mxu0 0.0
        %1844 = vmatmul.mubr.f32.gmra.mrb[0].mxu0 %v1751
        %v1845 = vpop.f32.mrb[0].mxu0
        %v1846 = vadd.f32 0.0, %v1845
        %v1847 = vpop.f32.mrb[0].mxu0
        %1848 = vmatprep.mubr.f32.mxu0 0.0
        %1849 = vmatmul.mubr.f32.gmra.mrb[0].mxu0 %v1752
        %v1850 = vpop.f32.mrb[0].mxu0
        %v1851 = vadd.f32 0.0, %v1850
        %v1852 = vpop.f32.mrb[0].mxu0
        %1853 = vmatprep.mubr.f32.mxu0 0.0
        %1854 = vmatmul.mubr.f32.gmra.mrb[0].mxu0 %v1753
        %v1855 = vpop.f32.mrb[0].mxu0
        %v1856 = vadd.f32 0.0, %v1855
        %v1857 = vpop.f32.mrb[0].mxu0
        %1858 = vdwg.mxu0
        %v1859 = vmul.f32 %v1821, 0.03125
        %v1860 = vmul.f32 %v1826, 0.03125
        %v1861 = vmul.f32 %v1831, 0.03125
        %v1862 = vmul.f32 %v1836, 0.03125
        %v1863 = vmul.f32 %v1841, 0.03125
        %v1864 = vmul.f32 %v1846, 0.03125
        %v1865 = vmul.f32 %v1851, 0.03125
        %v1866 = vmul.f32 %v1856, 0.03125
        %1867 = vrot.lane.b32.xlu0 %v671, 120
        %v1868 = vpop.permute.xlu0 %1867
        %1869 = vrot.lane.b32.xlu0 %v672, 120
        %v1870 = vpop.permute.xlu0 %1869
        %1871 = vrot.lane.b32.xlu0 %v673, 120
        %v1872 = vpop.permute.xlu0 %1871
        %1873 = vrot.lane.b32.xlu0 %v674, 120
        %v1874 = vpop.permute.xlu0 %1873
        %1875 = vrot.lane.b32.xlu0 %v675, 120
        %v1876 = vpop.permute.xlu0 %1875
        %1877 = vrot.lane.b32.xlu0 %v676, 120
        %v1878 = vpop.permute.xlu0 %1877
        %1879 = vrot.lane.b32.xlu0 %v677, 120
        %v1880 = vpop.permute.xlu0 %1879
        %1881 = vrot.lane.b32.xlu0 %v678, 120
        %v1882 = vpop.permute.xlu0 %1881
        %v1891 = vsub.f32 %v1859, %v1868
        %v1892 = vsub.f32 %v1860, %v1870
        %v1893 = vsub.f32 %v1861, %v1872
        %v1894 = vsub.f32 %v1862, %v1874
        %v1895 = vsub.f32 %v1863, %v1876
        %v1896 = vsub.f32 %v1864, %v1878
        %v1897 = vsub.f32 %v1865, %v1880
        %v1898 = vsub.f32 %v1866, %v1882
        %v1899 = vadd.f32 %v1891, 1e-05
        %v1900 = vadd.f32 %v1892, 1e-05
        %v1901 = vadd.f32 %v1893, 1e-05
        %v1902 = vadd.f32 %v1894, 1e-05
        %v1903 = vadd.f32 %v1895, 1e-05
        %v1904 = vadd.f32 %v1896, 1e-05
        %v1905 = vadd.f32 %v1897, 1e-05
        %v1906 = vadd.f32 %v1898, 1e-05
        %v1907 = vrsqrt.pop %v1899
        %v1908 = vrsqrt.pop %v1900
        %v1909 = vrsqrt.pop %v1901
        %v1910 = vrsqrt.pop %v1902
        %v1911 = vrsqrt.pop %v1903
        %v1912 = vrsqrt.pop %v1904
        %v1913 = vrsqrt.pop %v1905
        %v1914 = vrsqrt.pop %v1906
        %v1916 = vsel %vm703, %v1907, 0
        %v1919 = vsel %vm703, %v1908, 0
        %v1922 = vsel %vm703, %v1909, 0
        %v1925 = vsel %vm703, %v1910, 0
        %v1928 = vsel %vm703, %v1911, 0
        %v1931 = vsel %vm703, %v1912, 0
        %v1934 = vsel %vm703, %v1913, 0
        %v1937 = vsel %vm703, %v1914, 0
        %1939 = vmatprep.subr.mxu0 0.0
        %1940 = vmatpush1.msra.mxu0 %v730
        %1941 = vmatprep.subr.mxu0 0.0
        %1942 = vmatpush1.msra.mxu0 0.0
        %1943 = vmatprep.subr.mxu0 0.0
        %1944 = vmatpush1.msra.mxu0 0.0
        %1945 = vmatprep.subr.mxu0 0.0
        %1946 = vmatpush1.msra.mxu0 0.0
        %1947 = vmatprep.subr.mxu0 0.0
        %1948 = vmatpush1.msra.mxu0 0.0
        %1949 = vmatprep.subr.mxu0 0.0
        %1950 = vmatpush1.msra.mxu0 0.0
        %1951 = vmatprep.subr.mxu0 0.0
        %1952 = vmatpush1.msra.mxu0 0.0
        %1953 = vmatprep.subr.mxu0 0.0
        %1954 = vmatpush1.msra.mxu0 0.0
        %1955 = vmatprep.subr.mxu0 0.0
        %1956 = vmatpush1.msra.mxu0 0.0
        %1957 = vmatprep.subr.mxu0 0.0
        %1958 = vmatpush1.msra.mxu0 0.0
        %1959 = vmatprep.subr.mxu0 0.0
        %1960 = vmatpush1.msra.mxu0 0.0
        %1961 = vmatprep.subr.mxu0 0.0
        %1962 = vmatpush1.msra.mxu0 0.0
        %1963 = vmatprep.subr.mxu0 0.0
        %1964 = vmatpush1.msra.mxu0 0.0
        %1965 = vmatprep.subr.mxu0 0.0
        %1966 = vmatpush1.msra.mxu0 0.0
        %1967 = vmatprep.subr.mxu0 0.0
        %1968 = vmatpush1.msra.mxu0 0.0
        %1969 = vmatprep.subr.mxu0 0.0
        %1970 = vmatpush1.msra.mxu0 0.0
        %1971 = vmatprep.subr.mxu0 0.0
        %1972 = vmatpush1.msra.mxu0 0.0
        %1973 = vmatprep.subr.mxu0 0.0
        %1974 = vmatpush1.msra.mxu0 0.0
        %1975 = vmatprep.subr.mxu0 0.0
        %1976 = vmatpush1.msra.mxu0 0.0
        %1977 = vmatprep.subr.mxu0 0.0
        %1978 = vmatpush1.msra.mxu0 0.0
        %1979 = vmatprep.subr.mxu0 0.0
        %1980 = vmatpush1.msra.mxu0 0.0
        %1981 = vmatprep.subr.mxu0 0.0
        %1982 = vmatpush1.msra.mxu0 0.0
        %1983 = vmatprep.subr.mxu0 0.0
        %1984 = vmatpush1.msra.mxu0 0.0
        %1985 = vmatprep.subr.mxu0 0.0
        %1986 = vmatpush1.msra.mxu0 0.0
        %1987 = vmatprep.subr.mxu0 0.0
        %1988 = vmatpush1.msra.mxu0 0.0
        %1989 = vmatprep.subr.mxu0 0.0
        %1990 = vmatpush1.msra.mxu0 0.0
        %1991 = vmatprep.subr.mxu0 0.0
        %1992 = vmatpush1.msra.mxu0 0.0
        %1993 = vmatprep.subr.mxu0 0.0
        %1994 = vmatpush1.msra.mxu0 0.0
        %1995 = vmatprep.subr.mxu0 0.0
        %1996 = vmatpush1.msra.mxu0 0.0
        %1997 = vmatprep.subr.mxu0 0.0
        %1998 = vmatpush1.msra.mxu0 0.0
        %1999 = vmatprep.subr.mxu0 0.0
        %2000 = vmatpush1.msra.mxu0 0.0
        %2001 = vmatprep.subr.mxu0 0.0
        %2002 = vmatpush1.msra.mxu0 0.0
        %2003 = vmatprep.mubr.f32.mxu0 0.0
        %2004 = vmatmul.mubr.f32.gmra.mrb[0].mxu0 %v1916
        %v2005 = vpop.f32.mrb[0].mxu0
        %v2006 = vadd.f32 0.0, %v2005
        %v2007 = vpop.f32.mrb[0].mxu0
        %2008 = vmatprep.mubr.f32.mxu0 0.0
        %2009 = vmatmul.mubr.f32.gmra.mrb[0].mxu0 %v1919
        %v2010 = vpop.f32.mrb[0].mxu0
        %v2011 = vadd.f32 0.0, %v2010
        %v2012 = vpop.f32.mrb[0].mxu0
        %2013 = vmatprep.mubr.f32.mxu0 0.0
        %2014 = vmatmul.mubr.f32.gmra.mrb[0].mxu0 %v1922
        %v2015 = vpop.f32.mrb[0].mxu0
        %v2016 = vadd.f32 0.0, %v2015
        %v2017 = vpop.f32.mrb[0].mxu0
        %2018 = vmatprep.mubr.f32.mxu0 0.0
        %2019 = vmatmul.mubr.f32.gmra.mrb[0].mxu0 %v1925
        %v2020 = vpop.f32.mrb[0].mxu0
        %v2021 = vadd.f32 0.0, %v2020
        %v2022 = vpop.f32.mrb[0].mxu0
        %2023 = vmatprep.mubr.f32.mxu0 0.0
        %2024 = vmatmul.mubr.f32.gmra.mrb[0].mxu0 %v1928
        %v2025 = vpop.f32.mrb[0].mxu0
        %v2026 = vadd.f32 0.0, %v2025
        %v2027 = vpop.f32.mrb[0].mxu0
        %2028 = vmatprep.mubr.f32.mxu0 0.0
        %2029 = vmatmul.mubr.f32.gmra.mrb[0].mxu0 %v1931
        %v2030 = vpop.f32.mrb[0].mxu0
        %v2031 = vadd.f32 0.0, %v2030
        %v2032 = vpop.f32.mrb[0].mxu0
        %2033 = vmatprep.mubr.f32.mxu0 0.0
        %2034 = vmatmul.mubr.f32.gmra.mrb[0].mxu0 %v1934
        %v2035 = vpop.f32.mrb[0].mxu0
        %v2036 = vadd.f32 0.0, %v2035
        %v2037 = vpop.f32.mrb[0].mxu0
        %2038 = vmatprep.mubr.f32.mxu0 0.0
        %2039 = vmatmul.mubr.f32.gmra.mrb[0].mxu0 %v1937
        %v2040 = vpop.f32.mrb[0].mxu0
        %v2041 = vadd.f32 0.0, %v2040
        %v2042 = vpop.f32.mrb[0].mxu0
        %2043 = vdwg.mxu0
        %2044 = vrot.lane.b32.xlu0 %v1907, 8
        %v2045 = vpop.permute.xlu0 %2044
        %2046 = vrot.lane.b32.xlu0 %v1908, 8
        %v2047 = vpop.permute.xlu0 %2046
        %2048 = vrot.lane.b32.xlu0 %v1909, 8
        %v2049 = vpop.permute.xlu0 %2048
        %2050 = vrot.lane.b32.xlu0 %v1910, 8
        %v2051 = vpop.permute.xlu0 %2050
        %2052 = vrot.lane.b32.xlu0 %v1911, 8
        %v2053 = vpop.permute.xlu0 %2052
        %2054 = vrot.lane.b32.xlu0 %v1912, 8
        %v2055 = vpop.permute.xlu0 %2054
        %2056 = vrot.lane.b32.xlu0 %v1913, 8
        %v2057 = vpop.permute.xlu0 %2056
        %2058 = vrot.lane.b32.xlu0 %v1914, 8
        %v2059 = vpop.permute.xlu0 %2058
        %v2068 = vmul.f32 %v403, %v2045
        %v2069 = vmul.f32 %v408, %v2047
        %v2070 = vmul.f32 %v413, %v2049
        %v2071 = vmul.f32 %v418, %v2051
        %v2072 = vmul.f32 %v423, %v2053
        %v2073 = vmul.f32 %v428, %v2055
        %v2074 = vmul.f32 %v433, %v2057
        %v2075 = vmul.f32 %v438, %v2059
        %2084 = vrot.lane.b32.xlu0 %v2068, 120
        %v2085 = vpop.permute.xlu0 %2084
        %2086 = vrot.lane.b32.xlu0 %v2069, 120
        %v2087 = vpop.permute.xlu0 %2086
        %2088 = vrot.lane.b32.xlu0 %v2070, 120
        %v2089 = vpop.permute.xlu0 %2088
        %2090 = vrot.lane.b32.xlu0 %v2071, 120
        %v2091 = vpop.permute.xlu0 %2090
        %2092 = vrot.lane.b32.xlu0 %v2072, 120
        %v2093 = vpop.permute.xlu0 %2092
        %2094 = vrot.lane.b32.xlu0 %v2073, 120
        %v2095 = vpop.permute.xlu0 %2094
        %2096 = vrot.lane.b32.xlu0 %v2074, 120
        %v2097 = vpop.permute.xlu0 %2096
        %2098 = vrot.lane.b32.xlu0 %v2075, 120
        %v2099 = vpop.permute.xlu0 %2098
        %v2100 = vsel %vm703, %v2085, 0
        %v2102 = vsel %vm703, %v2087, 0
        %v2104 = vsel %vm703, %v2089, 0
        %v2106 = vsel %vm703, %v2091, 0
        %v2108 = vsel %vm703, %v2093, 0
        %v2110 = vsel %vm703, %v2095, 0
        %v2112 = vsel %vm703, %v2097, 0
        %v2114 = vsel %vm703, %v2099, 0
        %2116 = vmatprep.subr.mxu0 0.0
        %2117 = vmatpush1.msra.mxu0 %v730
        %2118 = vmatprep.subr.mxu0 0.0
        %2119 = vmatpush1.msra.mxu0 0.0
        %2120 = vmatprep.subr.mxu0 0.0
        %2121 = vmatpush1.msra.mxu0 0.0
        %2122 = vmatprep.subr.mxu0 0.0
        %2123 = vmatpush1.msra.mxu0 0.0
        %2124 = vmatprep.subr.mxu0 0.0
        %2125 = vmatpush1.msra.mxu0 0.0
        %2126 = vmatprep.subr.mxu0 0.0
        %2127 = vmatpush1.msra.mxu0 0.0
        %2128 = vmatprep.subr.mxu0 0.0
        %2129 = vmatpush1.msra.mxu0 0.0
        %2130 = vmatprep.subr.mxu0 0.0
        %2131 = vmatpush1.msra.mxu0 0.0
        %2132 = vmatprep.subr.mxu0 0.0
        %2133 = vmatpush1.msra.mxu0 0.0
        %2134 = vmatprep.subr.mxu0 0.0
        %2135 = vmatpush1.msra.mxu0 0.0
        %2136 = vmatprep.subr.mxu0 0.0
        %2137 = vmatpush1.msra.mxu0 0.0
        %2138 = vmatprep.subr.mxu0 0.0
        %2139 = vmatpush1.msra.mxu0 0.0
        %2140 = vmatprep.subr.mxu0 0.0
        %2141 = vmatpush1.msra.mxu0 0.0
        %2142 = vmatprep.subr.mxu0 0.0
        %2143 = vmatpush1.msra.mxu0 0.0
        %2144 = vmatprep.subr.mxu0 0.0
        %2145 = vmatpush1.msra.mxu0 0.0
        %2146 = vmatprep.subr.mxu0 0.0
        %2147 = vmatpush1.msra.mxu0 0.0
        %2148 = vmatprep.subr.mxu0 0.0
        %2149 = vmatpush1.msra.mxu0 0.0
        %2150 = vmatprep.subr.mxu0 0.0
        %2151 = vmatpush1.msra.mxu0 0.0
        %2152 = vmatprep.subr.mxu0 0.0
        %2153 = vmatpush1.msra.mxu0 0.0
        %2154 = vmatprep.subr.mxu0 0.0
        %2155 = vmatpush1.msra.mxu0 0.0
        %2156 = vmatprep.subr.mxu0 0.0
        %2157 = vmatpush1.msra.mxu0 0.0
        %2158 = vmatprep.subr.mxu0 0.0
        %2159 = vmatpush1.msra.mxu0 0.0
        %2160 = vmatprep.subr.mxu0 0.0
        %2161 = vmatpush1.msra.mxu0 0.0
        %2162 = vmatprep.subr.mxu0 0.0
        %2163 = vmatpush1.msra.mxu0 0.0
        %2164 = vmatprep.subr.mxu0 0.0
        %2165 = vmatpush1.msra.mxu0 0.0
        %2166 = vmatprep.subr.mxu0 0.0
        %2167 = vmatpush1.msra.mxu0 0.0
        %2168 = vmatprep.subr.mxu0 0.0
        %2169 = vmatpush1.msra.mxu0 0.0
        %2170 = vmatprep.subr.mxu0 0.0
        %2171 = vmatpush1.msra.mxu0 0.0
        %2172 = vmatprep.subr.mxu0 0.0
        %2173 = vmatpush1.msra.mxu0 0.0
        %2174 = vmatprep.subr.mxu0 0.0
        %2175 = vmatpush1.msra.mxu0 0.0
        %2176 = vmatprep.subr.mxu0 0.0
        %2177 = vmatpush1.msra.mxu0 0.0
        %2178 = vmatprep.subr.mxu0 0.0
        %2179 = vmatpush1.msra.mxu0 0.0
        %2180 = vmatprep.mubr.f32.mxu0 0.0
        %2181 = vmatmul.mubr.f32.gmra.mrb[0].mxu0 %v2100
        %v2182 = vpop.f32.mrb[0].mxu0
        %v2183 = vadd.f32 0.0, %v2182
        %v2184 = vpop.f32.mrb[0].mxu0
        %2185 = vmatprep.mubr.f32.mxu0 0.0
        %2186 = vmatmul.mubr.f32.gmra.mrb[0].mxu0 %v2102
        %v2187 = vpop.f32.mrb[0].mxu0
        %v2188 = vadd.f32 0.0, %v2187
        %v2189 = vpop.f32.mrb[0].mxu0
        %2190 = vmatprep.mubr.f32.mxu0 0.0
        %2191 = vmatmul.mubr.f32.gmra.mrb[0].mxu0 %v2104
        %v2192 = vpop.f32.mrb[0].mxu0
        %v2193 = vadd.f32 0.0, %v2192
        %v2194 = vpop.f32.mrb[0].mxu0
        %2195 = vmatprep.mubr.f32.mxu0 0.0
        %2196 = vmatmul.mubr.f32.gmra.mrb[0].mxu0 %v2106
        %v2197 = vpop.f32.mrb[0].mxu0
        %v2198 = vadd.f32 0.0, %v2197
        %v2199 = vpop.f32.mrb[0].mxu0
        %2200 = vmatprep.mubr.f32.mxu0 0.0
        %2201 = vmatmul.mubr.f32.gmra.mrb[0].mxu0 %v2108
        %v2202 = vpop.f32.mrb[0].mxu0
        %v2203 = vadd.f32 0.0, %v2202
        %v2204 = vpop.f32.mrb[0].mxu0
        %2205 = vmatprep.mubr.f32.mxu0 0.0
        %2206 = vmatmul.mubr.f32.gmra.mrb[0].mxu0 %v2110
        %v2207 = vpop.f32.mrb[0].mxu0
        %v2208 = vadd.f32 0.0, %v2207
        %v2209 = vpop.f32.mrb[0].mxu0
        %2210 = vmatprep.mubr.f32.mxu0 0.0
        %2211 = vmatmul.mubr.f32.gmra.mrb[0].mxu0 %v2112
        %v2212 = vpop.f32.mrb[0].mxu0
        %v2213 = vadd.f32 0.0, %v2212
        %v2214 = vpop.f32.mrb[0].mxu0
        %2215 = vmatprep.mubr.f32.mxu0 0.0
        %2216 = vmatmul.mubr.f32.gmra.mrb[0].mxu0 %v2114
        %v2217 = vpop.f32.mrb[0].mxu0
        %v2218 = vadd.f32 0.0, %v2217
        %v2219 = vpop.f32.mrb[0].mxu0
        %2220 = vdwg.mxu0
        %v2221 = vsub.f32 %v978, %v2183
        %v2222 = vsub.f32 %v978, %v2188
        %v2223 = vsub.f32 %v978, %v2193
        %v2224 = vsub.f32 %v978, %v2198
        %v2225 = vsub.f32 %v978, %v2203
        %v2226 = vsub.f32 %v978, %v2208
        %v2227 = vsub.f32 %v978, %v2213
        %v2228 = vsub.f32 %v978, %v2218
        %v2229 = vmul.f32 %v1708, %v2006
        %v2230 = vmul.f32 %v1713, %v2011
        %v2231 = vmul.f32 %v1718, %v2016
        %v2232 = vmul.f32 %v1723, %v2021
        %v2233 = vmul.f32 %v1728, %v2026
        %v2234 = vmul.f32 %v1733, %v2031
        %v2235 = vmul.f32 %v1738, %v2036
        %v2236 = vmul.f32 %v1743, %v2041
        %v2237 = vadd.f32 %v2229, %v2221
        %v2238 = vadd.f32 %v2230, %v2222
        %v2239 = vadd.f32 %v2231, %v2223
        %v2240 = vadd.f32 %v2232, %v2224
        %v2241 = vadd.f32 %v2233, %v2225
        %v2242 = vadd.f32 %v2234, %v2226
        %v2243 = vadd.f32 %v2235, %v2227
        %v2244 = vadd.f32 %v2236, %v2228
        %s2245 = scalar_lea.vmem %s269, 16 [#allocation2]
        %2246 = vst [vmem:[%s2245] sm:$0xff] %v2237
        %2247 = vst [vmem:[%s2245 + $0x20] sm:$0xff] %v2238
        %2248 = vst [vmem:[%s2245 + $0x40] sm:$0xff] %v2239
        %2249 = vst [vmem:[%s2245 + $0x60] sm:$0xff] %v2240
        %2250 = vst [vmem:[%s2245 + $0x80] sm:$0xff] %v2241
        %2251 = vst [vmem:[%s2245 + $0xa0] sm:$0xff] %v2242
        %2252 = vst [vmem:[%s2245 + $0xc0] sm:$0xff] %v2243
        %2253 = vst [vmem:[%s2245 + $0xe0] sm:$0xff] %v2244
        %v2254 = vld [vmem:[%s1 + $0x18] sm:$0xff]
        %v2255 = vld [vmem:[%s1 + $0x38] sm:$0xff]
        %v2256 = vld [vmem:[%s1 + $0x58] sm:$0xff]
        %v2257 = vld [vmem:[%s1 + $0x78] sm:$0xff]
        %2258 = vmatprep.subr.mxu0 0.0
        %2259 = vmatpush1.msra.mxu0 %v2254
        %2260 = vmatprep.subr.mxu0 0.0
        %2261 = vmatpush1.msra.mxu0 %v2255
        %2262 = vmatprep.subr.mxu0 0.0
        %2263 = vmatpush1.msra.mxu0 %v2256
        %2264 = vmatprep.subr.mxu0 0.0
        %2265 = vmatpush1.msra.mxu0 %v2257
        %2266 = vmatprep.subr.mxu0 0.0
        %2267 = vmatpush1.msra.mxu0 0.0
        %2268 = vmatprep.subr.mxu0 0.0
        %2269 = vmatpush1.msra.mxu0 0.0
        %2270 = vmatprep.subr.mxu0 0.0
        %2271 = vmatpush1.msra.mxu0 0.0
        %2272 = vmatprep.subr.mxu0 0.0
        %2273 = vmatpush1.msra.mxu0 0.0
        %2274 = vmatprep.subr.mxu0 0.0
        %2275 = vmatpush1.msra.mxu0 0.0
        %2276 = vmatprep.subr.mxu0 0.0
        %2277 = vmatpush1.msra.mxu0 0.0
        %2278 = vmatprep.subr.mxu0 0.0
        %2279 = vmatpush1.msra.mxu0 0.0
        %2280 = vmatprep.subr.mxu0 0.0
        %2281 = vmatpush1.msra.mxu0 0.0
        %2282 = vmatprep.subr.mxu0 0.0
        %2283 = vmatpush1.msra.mxu0 0.0
        %2284 = vmatprep.subr.mxu0 0.0
        %2285 = vmatpush1.msra.mxu0 0.0
        %2286 = vmatprep.subr.mxu0 0.0
        %2287 = vmatpush1.msra.mxu0 0.0
        %2288 = vmatprep.subr.mxu0 0.0
        %2289 = vmatpush1.msra.mxu0 0.0
        %2290 = vmatprep.subr.mxu0 0.0
        %2291 = vmatpush1.msra.mxu0 0.0
        %2292 = vmatprep.subr.mxu0 0.0
        %2293 = vmatpush1.msra.mxu0 0.0
        %2294 = vmatprep.subr.mxu0 0.0
        %2295 = vmatpush1.msra.mxu0 0.0
        %2296 = vmatprep.subr.mxu0 0.0
        %2297 = vmatpush1.msra.mxu0 0.0
        %2298 = vmatprep.subr.mxu0 0.0
        %2299 = vmatpush1.msra.mxu0 0.0
        %2300 = vmatprep.subr.mxu0 0.0
        %2301 = vmatpush1.msra.mxu0 0.0
        %2302 = vmatprep.subr.mxu0 0.0
        %2303 = vmatpush1.msra.mxu0 0.0
        %2304 = vmatprep.subr.mxu0 0.0
        %2305 = vmatpush1.msra.mxu0 0.0
        %2306 = vmatprep.subr.mxu0 0.0
        %2307 = vmatpush1.msra.mxu0 0.0
        %2308 = vmatprep.subr.mxu0 0.0
        %2309 = vmatpush1.msra.mxu0 0.0
        %2310 = vmatprep.subr.mxu0 0.0
        %2311 = vmatpush1.msra.mxu0 0.0
        %2312 = vmatprep.subr.mxu0 0.0
        %2313 = vmatpush1.msra.mxu0 0.0
        %2314 = vmatprep.subr.mxu0 0.0
        %2315 = vmatpush1.msra.mxu0 0.0
        %2316 = vmatprep.subr.mxu0 0.0
        %2317 = vmatpush1.msra.mxu0 0.0
        %2318 = vmatprep.subr.mxu0 0.0
        %2319 = vmatpush1.msra.mxu0 0.0
        %2320 = vmatprep.subr.mxu0 0.0
        %2321 = vmatpush1.msra.mxu0 0.0
        %2322 = vmatprep.mubr.f32.mxu0 0.0
        %2323 = vmatmul.mubr.f32.gmra.mrb[0].mxu0 %v313
        %v2324 = vpop.f32.mrb[0].mxu0
        %v2325 = vadd.f32 0.0, %v2324
        %v2326 = vpop.f32.mrb[0].mxu0
        %2327 = vmatprep.mubr.f32.mxu0 0.0
        %2328 = vmatmul.mubr.f32.gmra.mrb[0].mxu0 %v316
        %v2329 = vpop.f32.mrb[0].mxu0
        %v2330 = vadd.f32 0.0, %v2329
        %v2331 = vpop.f32.mrb[0].mxu0
        %2332 = vmatprep.mubr.f32.mxu0 0.0
        %2333 = vmatmul.mubr.f32.gmra.mrb[0].mxu0 %v319
        %v2334 = vpop.f32.mrb[0].mxu0
        %v2335 = vadd.f32 0.0, %v2334
        %v2336 = vpop.f32.mrb[0].mxu0
        %2337 = vmatprep.mubr.f32.mxu0 0.0
        %2338 = vmatmul.mubr.f32.gmra.mrb[0].mxu0 %v322
        %v2339 = vpop.f32.mrb[0].mxu0
        %v2340 = vadd.f32 0.0, %v2339
        %v2341 = vpop.f32.mrb[0].mxu0
        %2342 = vmatprep.mubr.f32.mxu0 0.0
        %2343 = vmatmul.mubr.f32.gmra.mrb[0].mxu0 %v325
        %v2344 = vpop.f32.mrb[0].mxu0
        %v2345 = vadd.f32 0.0, %v2344
        %v2346 = vpop.f32.mrb[0].mxu0
        %2347 = vmatprep.mubr.f32.mxu0 0.0
        %2348 = vmatmul.mubr.f32.gmra.mrb[0].mxu0 %v328
        %v2349 = vpop.f32.mrb[0].mxu0
        %v2350 = vadd.f32 0.0, %v2349
        %v2351 = vpop.f32.mrb[0].mxu0
        %2352 = vmatprep.mubr.f32.mxu0 0.0
        %2353 = vmatmul.mubr.f32.gmra.mrb[0].mxu0 %v331
        %v2354 = vpop.f32.mrb[0].mxu0
        %v2355 = vadd.f32 0.0, %v2354
        %v2356 = vpop.f32.mrb[0].mxu0
        %2357 = vmatprep.mubr.f32.mxu0 0.0
        %2358 = vmatmul.mubr.f32.gmra.mrb[0].mxu0 %v334
        %v2359 = vpop.f32.mrb[0].mxu0
        %v2360 = vadd.f32 0.0, %v2359
        %v2361 = vpop.f32.mrb[0].mxu0
        %2362 = vdwg.mxu0
        %v2363 = vmul.f32 %v2325, %v2325
        %v2364 = vmul.f32 %v2330, %v2330
        %v2365 = vmul.f32 %v2335, %v2335
        %v2366 = vmul.f32 %v2340, %v2340
        %v2367 = vmul.f32 %v2345, %v2345
        %v2368 = vmul.f32 %v2350, %v2350
        %v2369 = vmul.f32 %v2355, %v2355
        %v2370 = vmul.f32 %v2360, %v2360
        %2371 = vmatprep.subr.mxu0 0.0
        %2372 = vmatpush1.msra.mxu0 %v289
        %2373 = vmatprep.subr.mxu0 0.0
        %2374 = vmatpush1.msra.mxu0 %v290
        %2375 = vmatprep.subr.mxu0 0.0
        %2376 = vmatpush1.msra.mxu0 %v291
        %2377 = vmatprep.subr.mxu0 0.0
        %2378 = vmatpush1.msra.mxu0 %v292
        %2379 = vmatprep.subr.mxu0 0.0
        %2380 = vmatpush1.msra.mxu0 %v293
        %2381 = vmatprep.subr.mxu0 0.0
        %2382 = vmatpush1.msra.mxu0 %v294
        %2383 = vmatprep.subr.mxu0 0.0
        %2384 = vmatpush1.msra.mxu0 %v295
        %2385 = vmatprep.subr.mxu0 0.0
        %2386 = vmatpush1.msra.mxu0 %v296
        %2387 = vmatprep.subr.mxu0 0.0
        %2388 = vmatpush1.msra.mxu0 %v297
        %2389 = vmatprep.subr.mxu0 0.0
        %2390 = vmatpush1.msra.mxu0 %v298
        %2391 = vmatprep.subr.mxu0 0.0
        %2392 = vmatpush1.msra.mxu0 %v299
        %2393 = vmatprep.subr.mxu0 0.0
        %2394 = vmatpush1.msra.mxu0 %v300
        %2395 = vmatprep.subr.mxu0 0.0
        %2396 = vmatpush1.msra.mxu0 %v301
        %2397 = vmatprep.subr.mxu0 0.0
        %2398 = vmatpush1.msra.mxu0 %v302
        %2399 = vmatprep.subr.mxu0 0.0
        %2400 = vmatpush1.msra.mxu0 %v303
        %2401 = vmatprep.subr.mxu0 0.0
        %2402 = vmatpush1.msra.mxu0 %v304
        %2403 = vmatprep.subr.mxu0 0.0
        %2404 = vmatpush1.msra.mxu0 0.0
        %2405 = vmatprep.subr.mxu0 0.0
        %2406 = vmatpush1.msra.mxu0 0.0
        %2407 = vmatprep.subr.mxu0 0.0
        %2408 = vmatpush1.msra.mxu0 0.0
        %2409 = vmatprep.subr.mxu0 0.0
        %2410 = vmatpush1.msra.mxu0 0.0
        %2411 = vmatprep.subr.mxu0 0.0
        %2412 = vmatpush1.msra.mxu0 0.0
        %2413 = vmatprep.subr.mxu0 0.0
        %2414 = vmatpush1.msra.mxu0 0.0
        %2415 = vmatprep.subr.mxu0 0.0
        %2416 = vmatpush1.msra.mxu0 0.0
        %2417 = vmatprep.subr.mxu0 0.0
        %2418 = vmatpush1.msra.mxu0 0.0
        %2419 = vmatprep.subr.mxu0 0.0
        %2420 = vmatpush1.msra.mxu0 0.0
        %2421 = vmatprep.subr.mxu0 0.0
        %2422 = vmatpush1.msra.mxu0 0.0
        %2423 = vmatprep.subr.mxu0 0.0
        %2424 = vmatpush1.msra.mxu0 0.0
        %2425 = vmatprep.subr.mxu0 0.0
        %2426 = vmatpush1.msra.mxu0 0.0
        %2427 = vmatprep.subr.mxu0 0.0
        %2428 = vmatpush1.msra.mxu0 0.0
        %2429 = vmatprep.subr.mxu0 0.0
        %2430 = vmatpush1.msra.mxu0 0.0
        %2431 = vmatprep.subr.mxu0 0.0
        %2432 = vmatpush1.msra.mxu0 0.0
        %2433 = vmatprep.subr.mxu0 0.0
        %2434 = vmatpush1.msra.mxu0 0.0
        %2435 = vmatprep.mubr.f32.mxu0 0.0
        %2436 = vmatmul.mubr.f32.gmra.mrb[0].mxu0 %v2363
        %v2437 = vpop.f32.mrb[0].mxu0
        %v2438 = vadd.f32 0.0, %v2437
        %v2439 = vpop.f32.mrb[0].mxu0
        %2440 = vmatprep.mubr.f32.mxu0 0.0
        %2441 = vmatmul.mubr.f32.gmra.mrb[0].mxu0 %v2364
        %v2442 = vpop.f32.mrb[0].mxu0
        %v2443 = vadd.f32 0.0, %v2442
        %v2444 = vpop.f32.mrb[0].mxu0
        %2445 = vmatprep.mubr.f32.mxu0 0.0
        %2446 = vmatmul.mubr.f32.gmra.mrb[0].mxu0 %v2365
        %v2447 = vpop.f32.mrb[0].mxu0
        %v2448 = vadd.f32 0.0, %v2447
        %v2449 = vpop.f32.mrb[0].mxu0
        %2450 = vmatprep.mubr.f32.mxu0 0.0
        %2451 = vmatmul.mubr.f32.gmra.mrb[0].mxu0 %v2366
        %v2452 = vpop.f32.mrb[0].mxu0
        %v2453 = vadd.f32 0.0, %v2452
        %v2454 = vpop.f32.mrb[0].mxu0
        %2455 = vmatprep.mubr.f32.mxu0 0.0
        %2456 = vmatmul.mubr.f32.gmra.mrb[0].mxu0 %v2367
        %v2457 = vpop.f32.mrb[0].mxu0
        %v2458 = vadd.f32 0.0, %v2457
        %v2459 = vpop.f32.mrb[0].mxu0
        %2460 = vmatprep.mubr.f32.mxu0 0.0
        %2461 = vmatmul.mubr.f32.gmra.mrb[0].mxu0 %v2368
        %v2462 = vpop.f32.mrb[0].mxu0
        %v2463 = vadd.f32 0.0, %v2462
        %v2464 = vpop.f32.mrb[0].mxu0
        %2465 = vmatprep.mubr.f32.mxu0 0.0
        %2466 = vmatmul.mubr.f32.gmra.mrb[0].mxu0 %v2369
        %v2467 = vpop.f32.mrb[0].mxu0
        %v2468 = vadd.f32 0.0, %v2467
        %v2469 = vpop.f32.mrb[0].mxu0
        %2470 = vmatprep.mubr.f32.mxu0 0.0
        %2471 = vmatmul.mubr.f32.gmra.mrb[0].mxu0 %v2370
        %v2472 = vpop.f32.mrb[0].mxu0
        %v2473 = vadd.f32 0.0, %v2472
        %v2474 = vpop.f32.mrb[0].mxu0
        %2475 = vdwg.mxu0
        %v2476 = vmul.f32 %v2438, 0.03125
        %v2477 = vmul.f32 %v2443, 0.03125
        %v2478 = vmul.f32 %v2448, 0.03125
        %v2479 = vmul.f32 %v2453, 0.03125
        %v2480 = vmul.f32 %v2458, 0.03125
        %v2481 = vmul.f32 %v2463, 0.03125
        %v2482 = vmul.f32 %v2468, 0.03125
        %v2483 = vmul.f32 %v2473, 0.03125
        %2484 = vrot.lane.b32.xlu0 %v671, 116
        %v2485 = vpop.permute.xlu0 %2484
        %2486 = vrot.lane.b32.xlu0 %v672, 116
        %v2487 = vpop.permute.xlu0 %2486
        %2488 = vrot.lane.b32.xlu0 %v673, 116
        %v2489 = vpop.permute.xlu0 %2488
        %2490 = vrot.lane.b32.xlu0 %v674, 116
        %v2491 = vpop.permute.xlu0 %2490
        %2492 = vrot.lane.b32.xlu0 %v675, 116
        %v2493 = vpop.permute.xlu0 %2492
        %2494 = vrot.lane.b32.xlu0 %v676, 116
        %v2495 = vpop.permute.xlu0 %2494
        %2496 = vrot.lane.b32.xlu0 %v677, 116
        %v2497 = vpop.permute.xlu0 %2496
        %2498 = vrot.lane.b32.xlu0 %v678, 116
        %v2499 = vpop.permute.xlu0 %2498
        %v2508 = vsub.f32 %v2476, %v2485
        %v2509 = vsub.f32 %v2477, %v2487
        %v2510 = vsub.f32 %v2478, %v2489
        %v2511 = vsub.f32 %v2479, %v2491
        %v2512 = vsub.f32 %v2480, %v2493
        %v2513 = vsub.f32 %v2481, %v2495
        %v2514 = vsub.f32 %v2482, %v2497
        %v2515 = vsub.f32 %v2483, %v2499
        %v2516 = vadd.f32 %v2508, 1e-05
        %v2517 = vadd.f32 %v2509, 1e-05
        %v2518 = vadd.f32 %v2510, 1e-05
        %v2519 = vadd.f32 %v2511, 1e-05
        %v2520 = vadd.f32 %v2512, 1e-05
        %v2521 = vadd.f32 %v2513, 1e-05
        %v2522 = vadd.f32 %v2514, 1e-05
        %v2523 = vadd.f32 %v2515, 1e-05
        %v2524 = vrsqrt.pop %v2516
        %v2525 = vrsqrt.pop %v2517
        %v2526 = vrsqrt.pop %v2518
        %v2527 = vrsqrt.pop %v2519
        %v2528 = vrsqrt.pop %v2520
        %v2529 = vrsqrt.pop %v2521
        %v2530 = vrsqrt.pop %v2522
        %v2531 = vrsqrt.pop %v2523
        %v2533 = vsel %vm703, %v2524, 0
        %v2536 = vsel %vm703, %v2525, 0
        %v2539 = vsel %vm703, %v2526, 0
        %v2542 = vsel %vm703, %v2527, 0
        %v2545 = vsel %vm703, %v2528, 0
        %v2548 = vsel %vm703, %v2529, 0
        %v2551 = vsel %vm703, %v2530, 0
        %v2554 = vsel %vm703, %v2531, 0
        %2556 = vmatprep.subr.mxu0 0.0
        %2557 = vmatpush1.msra.mxu0 %v730
        %2558 = vmatprep.subr.mxu0 0.0
        %2559 = vmatpush1.msra.mxu0 0.0
        %2560 = vmatprep.subr.mxu0 0.0
        %2561 = vmatpush1.msra.mxu0 0.0
        %2562 = vmatprep.subr.mxu0 0.0
        %2563 = vmatpush1.msra.mxu0 0.0
        %2564 = vmatprep.subr.mxu0 0.0
        %2565 = vmatpush1.msra.mxu0 0.0
        %2566 = vmatprep.subr.mxu0 0.0
        %2567 = vmatpush1.msra.mxu0 0.0
        %2568 = vmatprep.subr.mxu0 0.0
        %2569 = vmatpush1.msra.mxu0 0.0
        %2570 = vmatprep.subr.mxu0 0.0
        %2571 = vmatpush1.msra.mxu0 0.0
        %2572 = vmatprep.subr.mxu0 0.0
        %2573 = vmatpush1.msra.mxu0 0.0
        %2574 = vmatprep.subr.mxu0 0.0
        %2575 = vmatpush1.msra.mxu0 0.0
        %2576 = vmatprep.subr.mxu0 0.0
        %2577 = vmatpush1.msra.mxu0 0.0
        %2578 = vmatprep.subr.mxu0 0.0
        %2579 = vmatpush1.msra.mxu0 0.0
        %2580 = vmatprep.subr.mxu0 0.0
        %2581 = vmatpush1.msra.mxu0 0.0
        %2582 = vmatprep.subr.mxu0 0.0
        %2583 = vmatpush1.msra.mxu0 0.0
        %2584 = vmatprep.subr.mxu0 0.0
        %2585 = vmatpush1.msra.mxu0 0.0
        %2586 = vmatprep.subr.mxu0 0.0
        %2587 = vmatpush1.msra.mxu0 0.0
        %2588 = vmatprep.subr.mxu0 0.0
        %2589 = vmatpush1.msra.mxu0 0.0
        %2590 = vmatprep.subr.mxu0 0.0
        %2591 = vmatpush1.msra.mxu0 0.0
        %2592 = vmatprep.subr.mxu0 0.0
        %2593 = vmatpush1.msra.mxu0 0.0
        %2594 = vmatprep.subr.mxu0 0.0
        %2595 = vmatpush1.msra.mxu0 0.0
        %2596 = vmatprep.subr.mxu0 0.0
        %2597 = vmatpush1.msra.mxu0 0.0
        %2598 = vmatprep.subr.mxu0 0.0
        %2599 = vmatpush1.msra.mxu0 0.0
        %2600 = vmatprep.subr.mxu0 0.0
        %2601 = vmatpush1.msra.mxu0 0.0
        %2602 = vmatprep.subr.mxu0 0.0
        %2603 = vmatpush1.msra.mxu0 0.0
        %2604 = vmatprep.subr.mxu0 0.0
        %2605 = vmatpush1.msra.mxu0 0.0
        %2606 = vmatprep.subr.mxu0 0.0
        %2607 = vmatpush1.msra.mxu0 0.0
        %2608 = vmatprep.subr.mxu0 0.0
        %2609 = vmatpush1.msra.mxu0 0.0
        %2610 = vmatprep.subr.mxu0 0.0
        %2611 = vmatpush1.msra.mxu0 0.0
        %2612 = vmatprep.subr.mxu0 0.0
        %2613 = vmatpush1.msra.mxu0 0.0
        %2614 = vmatprep.subr.mxu0 0.0
        %2615 = vmatpush1.msra.mxu0 0.0
        %2616 = vmatprep.subr.mxu0 0.0
        %2617 = vmatpush1.msra.mxu0 0.0
        %2618 = vmatprep.subr.mxu0 0.0
        %2619 = vmatpush1.msra.mxu0 0.0
        %2620 = vmatprep.mubr.f32.mxu0 0.0
        %2621 = vmatmul.mubr.f32.gmra.mrb[0].mxu0 %v2533
        %v2622 = vpop.f32.mrb[0].mxu0
        %v2623 = vadd.f32 0.0, %v2622
        %v2624 = vpop.f32.mrb[0].mxu0
        %2625 = vmatprep.mubr.f32.mxu0 0.0
        %2626 = vmatmul.mubr.f32.gmra.mrb[0].mxu0 %v2536
        %v2627 = vpop.f32.mrb[0].mxu0
        %v2628 = vadd.f32 0.0, %v2627
        %v2629 = vpop.f32.mrb[0].mxu0
        %2630 = vmatprep.mubr.f32.mxu0 0.0
        %2631 = vmatmul.mubr.f32.gmra.mrb[0].mxu0 %v2539
        %v2632 = vpop.f32.mrb[0].mxu0
        %v2633 = vadd.f32 0.0, %v2632
        %v2634 = vpop.f32.mrb[0].mxu0
        %2635 = vmatprep.mubr.f32.mxu0 0.0
        %2636 = vmatmul.mubr.f32.gmra.mrb[0].mxu0 %v2542
        %v2637 = vpop.f32.mrb[0].mxu0
        %v2638 = vadd.f32 0.0, %v2637
        %v2639 = vpop.f32.mrb[0].mxu0
        %2640 = vmatprep.mubr.f32.mxu0 0.0
        %2641 = vmatmul.mubr.f32.gmra.mrb[0].mxu0 %v2545
        %v2642 = vpop.f32.mrb[0].mxu0
        %v2643 = vadd.f32 0.0, %v2642
        %v2644 = vpop.f32.mrb[0].mxu0
        %2645 = vmatprep.mubr.f32.mxu0 0.0
        %2646 = vmatmul.mubr.f32.gmra.mrb[0].mxu0 %v2548
        %v2647 = vpop.f32.mrb[0].mxu0
        %v2648 = vadd.f32 0.0, %v2647
        %v2649 = vpop.f32.mrb[0].mxu0
        %2650 = vmatprep.mubr.f32.mxu0 0.0
        %2651 = vmatmul.mubr.f32.gmra.mrb[0].mxu0 %v2551
        %v2652 = vpop.f32.mrb[0].mxu0
        %v2653 = vadd.f32 0.0, %v2652
        %v2654 = vpop.f32.mrb[0].mxu0
        %2655 = vmatprep.mubr.f32.mxu0 0.0
        %2656 = vmatmul.mubr.f32.gmra.mrb[0].mxu0 %v2554
        %v2657 = vpop.f32.mrb[0].mxu0
        %v2658 = vadd.f32 0.0, %v2657
        %v2659 = vpop.f32.mrb[0].mxu0
        %2660 = vdwg.mxu0
        %2661 = vrot.lane.b32.xlu0 %v2524, 12
        %v2662 = vpop.permute.xlu0 %2661
        %2663 = vrot.lane.b32.xlu0 %v2525, 12
        %v2664 = vpop.permute.xlu0 %2663
        %2665 = vrot.lane.b32.xlu0 %v2526, 12
        %v2666 = vpop.permute.xlu0 %2665
        %2667 = vrot.lane.b32.xlu0 %v2527, 12
        %v2668 = vpop.permute.xlu0 %2667
        %2669 = vrot.lane.b32.xlu0 %v2528, 12
        %v2670 = vpop.permute.xlu0 %2669
        %2671 = vrot.lane.b32.xlu0 %v2529, 12
        %v2672 = vpop.permute.xlu0 %2671
        %2673 = vrot.lane.b32.xlu0 %v2530, 12
        %v2674 = vpop.permute.xlu0 %2673
        %2675 = vrot.lane.b32.xlu0 %v2531, 12
        %v2676 = vpop.permute.xlu0 %2675
        %v2685 = vmul.f32 %v403, %v2662
        %v2686 = vmul.f32 %v408, %v2664
        %v2687 = vmul.f32 %v413, %v2666
        %v2688 = vmul.f32 %v418, %v2668
        %v2689 = vmul.f32 %v423, %v2670
        %v2690 = vmul.f32 %v428, %v2672
        %v2691 = vmul.f32 %v433, %v2674
        %v2692 = vmul.f32 %v438, %v2676
        %2701 = vrot.lane.b32.xlu0 %v2685, 116
        %v2702 = vpop.permute.xlu0 %2701
        %2703 = vrot.lane.b32.xlu0 %v2686, 116
        %v2704 = vpop.permute.xlu0 %2703
        %2705 = vrot.lane.b32.xlu0 %v2687, 116
        %v2706 = vpop.permute.xlu0 %2705
        %2707 = vrot.lane.b32.xlu0 %v2688, 116
        %v2708 = vpop.permute.xlu0 %2707
        %2709 = vrot.lane.b32.xlu0 %v2689, 116
        %v2710 = vpop.permute.xlu0 %2709
        %2711 = vrot.lane.b32.xlu0 %v2690, 116
        %v2712 = vpop.permute.xlu0 %2711
        %2713 = vrot.lane.b32.xlu0 %v2691, 116
        %v2714 = vpop.permute.xlu0 %2713
        %2715 = vrot.lane.b32.xlu0 %v2692, 116
        %v2716 = vpop.permute.xlu0 %2715
        %v2717 = vsel %vm703, %v2702, 0
        %v2719 = vsel %vm703, %v2704, 0
        %v2721 = vsel %vm703, %v2706, 0
        %v2723 = vsel %vm703, %v2708, 0
        %v2725 = vsel %vm703, %v2710, 0
        %v2727 = vsel %vm703, %v2712, 0
        %v2729 = vsel %vm703, %v2714, 0
        %v2731 = vsel %vm703, %v2716, 0
        %2733 = vmatprep.subr.mxu0 0.0
        %2734 = vmatpush1.msra.mxu0 %v730
        %2735 = vmatprep.subr.mxu0 0.0
        %2736 = vmatpush1.msra.mxu0 0.0
        %2737 = vmatprep.subr.mxu0 0.0
        %2738 = vmatpush1.msra.mxu0 0.0
        %2739 = vmatprep.subr.mxu0 0.0
        %2740 = vmatpush1.msra.mxu0 0.0
        %2741 = vmatprep.subr.mxu0 0.0
        %2742 = vmatpush1.msra.mxu0 0.0
        %2743 = vmatprep.subr.mxu0 0.0
        %2744 = vmatpush1.msra.mxu0 0.0
        %2745 = vmatprep.subr.mxu0 0.0
        %2746 = vmatpush1.msra.mxu0 0.0
        %2747 = vmatprep.subr.mxu0 0.0
        %2748 = vmatpush1.msra.mxu0 0.0
        %2749 = vmatprep.subr.mxu0 0.0
        %2750 = vmatpush1.msra.mxu0 0.0
        %2751 = vmatprep.subr.mxu0 0.0
        %2752 = vmatpush1.msra.mxu0 0.0
        %2753 = vmatprep.subr.mxu0 0.0
        %2754 = vmatpush1.msra.mxu0 0.0
        %2755 = vmatprep.subr.mxu0 0.0
        %2756 = vmatpush1.msra.mxu0 0.0
        %2757 = vmatprep.subr.mxu0 0.0
        %2758 = vmatpush1.msra.mxu0 0.0
        %2759 = vmatprep.subr.mxu0 0.0
        %2760 = vmatpush1.msra.mxu0 0.0
        %2761 = vmatprep.subr.mxu0 0.0
        %2762 = vmatpush1.msra.mxu0 0.0
        %2763 = vmatprep.subr.mxu0 0.0
        %2764 = vmatpush1.msra.mxu0 0.0
        %2765 = vmatprep.subr.mxu0 0.0
        %2766 = vmatpush1.msra.mxu0 0.0
        %2767 = vmatprep.subr.mxu0 0.0
        %2768 = vmatpush1.msra.mxu0 0.0
        %2769 = vmatprep.subr.mxu0 0.0
        %2770 = vmatpush1.msra.mxu0 0.0
        %2771 = vmatprep.subr.mxu0 0.0
        %2772 = vmatpush1.msra.mxu0 0.0
        %2773 = vmatprep.subr.mxu0 0.0
        %2774 = vmatpush1.msra.mxu0 0.0
        %2775 = vmatprep.subr.mxu0 0.0
        %2776 = vmatpush1.msra.mxu0 0.0
        %2777 = vmatprep.subr.mxu0 0.0
        %2778 = vmatpush1.msra.mxu0 0.0
        %2779 = vmatprep.subr.mxu0 0.0
        %2780 = vmatpush1.msra.mxu0 0.0
        %2781 = vmatprep.subr.mxu0 0.0
        %2782 = vmatpush1.msra.mxu0 0.0
        %2783 = vmatprep.subr.mxu0 0.0
        %2784 = vmatpush1.msra.mxu0 0.0
        %2785 = vmatprep.subr.mxu0 0.0
        %2786 = vmatpush1.msra.mxu0 0.0
        %2787 = vmatprep.subr.mxu0 0.0
        %2788 = vmatpush1.msra.mxu0 0.0
        %2789 = vmatprep.subr.mxu0 0.0
        %2790 = vmatpush1.msra.mxu0 0.0
        %2791 = vmatprep.subr.mxu0 0.0
        %2792 = vmatpush1.msra.mxu0 0.0
        %2793 = vmatprep.subr.mxu0 0.0
        %2794 = vmatpush1.msra.mxu0 0.0
        %2795 = vmatprep.subr.mxu0 0.0
        %2796 = vmatpush1.msra.mxu0 0.0
        %2797 = vmatprep.mubr.f32.mxu0 0.0
        %2798 = vmatmul.mubr.f32.gmra.mrb[0].mxu0 %v2717
        %v2799 = vpop.f32.mrb[0].mxu0
        %v2800 = vadd.f32 0.0, %v2799
        %v2801 = vpop.f32.mrb[0].mxu0
        %2802 = vmatprep.mubr.f32.mxu0 0.0
        %2803 = vmatmul.mubr.f32.gmra.mrb[0].mxu0 %v2719
        %v2804 = vpop.f32.mrb[0].mxu0
        %v2805 = vadd.f32 0.0, %v2804
        %v2806 = vpop.f32.mrb[0].mxu0
        %2807 = vmatprep.mubr.f32.mxu0 0.0
        %2808 = vmatmul.mubr.f32.gmra.mrb[0].mxu0 %v2721
        %v2809 = vpop.f32.mrb[0].mxu0
        %v2810 = vadd.f32 0.0, %v2809
        %v2811 = vpop.f32.mrb[0].mxu0
        %2812 = vmatprep.mubr.f32.mxu0 0.0
        %2813 = vmatmul.mubr.f32.gmra.mrb[0].mxu0 %v2723
        %v2814 = vpop.f32.mrb[0].mxu0
        %v2815 = vadd.f32 0.0, %v2814
        %v2816 = vpop.f32.mrb[0].mxu0
        %2817 = vmatprep.mubr.f32.mxu0 0.0
        %2818 = vmatmul.mubr.f32.gmra.mrb[0].mxu0 %v2725
        %v2819 = vpop.f32.mrb[0].mxu0
        %v2820 = vadd.f32 0.0, %v2819
        %v2821 = vpop.f32.mrb[0].mxu0
        %2822 = vmatprep.mubr.f32.mxu0 0.0
        %2823 = vmatmul.mubr.f32.gmra.mrb[0].mxu0 %v2727
        %v2824 = vpop.f32.mrb[0].mxu0
        %v2825 = vadd.f32 0.0, %v2824
        %v2826 = vpop.f32.mrb[0].mxu0
        %2827 = vmatprep.mubr.f32.mxu0 0.0
        %2828 = vmatmul.mubr.f32.gmra.mrb[0].mxu0 %v2729
        %v2829 = vpop.f32.mrb[0].mxu0
        %v2830 = vadd.f32 0.0, %v2829
        %v2831 = vpop.f32.mrb[0].mxu0
        %2832 = vmatprep.mubr.f32.mxu0 0.0
        %2833 = vmatmul.mubr.f32.gmra.mrb[0].mxu0 %v2731
        %v2834 = vpop.f32.mrb[0].mxu0
        %v2835 = vadd.f32 0.0, %v2834
        %v2836 = vpop.f32.mrb[0].mxu0
        %2837 = vdwg.mxu0
        %v2838 = vsub.f32 %v978, %v2800
        %v2839 = vsub.f32 %v978, %v2805
        %v2840 = vsub.f32 %v978, %v2810
        %v2841 = vsub.f32 %v978, %v2815
        %v2842 = vsub.f32 %v978, %v2820
        %v2843 = vsub.f32 %v978, %v2825
        %v2844 = vsub.f32 %v978, %v2830
        %v2845 = vsub.f32 %v978, %v2835
        %v2846 = vmul.f32 %v2325, %v2623
        %v2847 = vmul.f32 %v2330, %v2628
        %v2848 = vmul.f32 %v2335, %v2633
        %v2849 = vmul.f32 %v2340, %v2638
        %v2850 = vmul.f32 %v2345, %v2643
        %v2851 = vmul.f32 %v2350, %v2648
        %v2852 = vmul.f32 %v2355, %v2653
        %v2853 = vmul.f32 %v2360, %v2658
        %v2854 = vadd.f32 %v2846, %v2838
        %v2855 = vadd.f32 %v2847, %v2839
        %v2856 = vadd.f32 %v2848, %v2840
        %v2857 = vadd.f32 %v2849, %v2841
        %v2858 = vadd.f32 %v2850, %v2842
        %v2859 = vadd.f32 %v2851, %v2843
        %v2860 = vadd.f32 %v2852, %v2844
        %v2861 = vadd.f32 %v2853, %v2845
        %s2862 = scalar_lea.vmem %s269, 24 [#allocation2]
        %2863 = vst [vmem:[%s2862] sm:$0xff] %v2854
        %2864 = vst [vmem:[%s2862 + $0x20] sm:$0xff] %v2855
        %2865 = vst [vmem:[%s2862 + $0x40] sm:$0xff] %v2856
        %2866 = vst [vmem:[%s2862 + $0x60] sm:$0xff] %v2857
        %2867 = vst [vmem:[%s2862 + $0x80] sm:$0xff] %v2858
        %2868 = vst [vmem:[%s2862 + $0xa0] sm:$0xff] %v2859
        %2869 = vst [vmem:[%s2862 + $0xc0] sm:$0xff] %v2860
        %2870 = vst [vmem:[%s2862 + $0xe0] sm:$0xff] %v2861
        %s2871 = sand.u32 %s175, 1
        %s2872 = scalar_lea.sflag [#allocation3], %s2871
        %s2873 = sand.u32 %s175, 1
        %s2874 = smul.addr %s2873, 256
        %s2875 = scalar_lea.vmem [#allocation2], %s2874
        // Predicated region
        $region45: #{tpu_custom_call.1} parent=43 // pred_check
          %p2876 = pneg %p185
        $region46: #{tpu_custom_call.1} parent=43 // pred_check_branch
          %2878 = sbr.rel (%p2876) target = $region48
        $region47: #{tpu_custom_call.1} parent=43 // pred_region
          %s2879 = smul.u32 8, %s25
          %s2881 = ssub.s32 4096, 4096
          %2882 = vsyncadd %s2872, %s2881
          %s2883 = smul.addr %s2879, 4
          %s2884 = smul.addr %s24, 32
          %s2885 = sadd.s32 %s2883, %s2884
          %s2886 = smul.addr %s2885, 128
          %s2887 = scalar_lea.hbm %s6, %s2886
          %s2888 = sshll.u32 %s2875, 4
          %s2889 = int_to_ptr.vmem [resolvable:$true] %s2888
          %2894 = dma.vmem_to_hbm [thread:$0]  %s2889, 4096, %s2887, %s2872, 128, 128, 8
        $region48: #{tpu_custom_call.1} parent=43 // pred_fallthru
          _
      $region44: #{tpu_custom_call.1} parent=5 // pred_fallthru
        _
      %p2895 = scmp.le.s32.totalorder 2, %s15
      // Predicated region
      $region49: #{tpu_custom_call.1} parent=5 // pred_check
        %p2896 = pneg %p2895
      $region50: #{tpu_custom_call.1} parent=5 // pred_check_branch
        %2898 = sbr.rel (%p2896) target = $region52
      $region51: #{tpu_custom_call.1} parent=5 // pred_region
        %s2899 = ssub.s32 %s15, 2
        // Predicated region
        $region53: #{tpu_custom_call.1} parent=51 // pred_check
          %p2900 = pneg %p191
        $region54: #{tpu_custom_call.1} parent=51 // pred_check_branch
          %2902 = sbr.rel (%p2900) target = $region56
        $region55: #{tpu_custom_call.1} parent=51 // pred_region
          %s2903 = sand.u32 %s176, 1
          %s2904 = scalar_lea.sflag [#allocation3], %s2903
          %s2905 = sand.u32 %s176, 1
          %s2906 = smul.addr %s2905, 256
          %s2907 = scalar_lea.vmem [#allocation2], %s2906
          %2908 = dma.done %s2904, 4096
        $region56: #{tpu_custom_call.1} parent=51 // pred_fallthru
          _
      $region52: #{tpu_custom_call.1} parent=5 // pred_fallthru
        _
    $region6: #{tpu_custom_call.1} parent=1 // loop_footer
      %s19 = sadd.s32 1, %s15
    $region7: #{tpu_custom_call.1} parent=1 // loop_footer_branch
      %14 = sbr.rel target = $region3
    $region8: #{tpu_custom_call.1} parent=1 // loop_exit
      _
    %2909 = vsyncpa [#allocation3], 1
    %s2910 = scalar_lea.sflag [#allocation3], 1
    %2911 = vsyncpa %s2910, 1

</llo_original>
